<compile_context>
chip_gen: v7x
topology: tpu7x:2x2x1
jax: 0.10.0
libtpu: 0.0.40
codegen_flags: <defaults>
</compile_context>

<pallas_src>
import math
import functools

import jax
import jax.numpy as jnp
from jax.experimental import pallas as pl
from jax.experimental.pallas import tpu as pltpu


def mha_kernel(x_ref, mbias_ref, wq_ref, bq_ref, wk_ref, bk_ref,
               wv_ref, bv_ref, wo_ref, bo_ref, out_ref, *, n_heads):
    qlen, dim = x_ref.shape[1], x_ref.shape[2]
    dph = dim // n_heads

    x = x_ref[0].astype(jnp.bfloat16)        # (qlen, dim) bf16 for the MXU
    mbias = mbias_ref[0]                     # (1, klen) additive mask bias, f32

    def project(w_ref, b_ref):
        # Fused, lane-dense projection: (qlen, dim) @ (dim, dim) -> f32.
        y = jnp.dot(x, w_ref[...], preferred_element_type=jnp.float32) + b_ref[...]
        # Split heads into a leading batch axis: (qlen, dim) -> (n_heads, qlen, dph).
        yh = jnp.stack([y[:, h * dph:(h + 1) * dph] for h in range(n_heads)], axis=0)
        return yh.astype(jnp.bfloat16)

    qh = project(wq_ref, bq_ref)             # scale already folded into wq/bq
    kh = project(wk_ref, bk_ref)
    vh = project(wv_ref, bv_ref)

    # scores[h, q, k] = sum_f qh[h, q, f] * kh[h, k, f]   (no explicit kh.T)
    scores = jax.lax.dot_general(
        qh, kh,
        dimension_numbers=(((2,), (2,)), ((0,), (0,))),
        preferred_element_type=jnp.float32)  # (n_heads, qlen, klen) f32
    scores = scores + mbias                  # additive mask: 0 attend / -1e30 masked

    # Softmax over klen in f32; reciprocal goes to the EUP slot.
    m = jnp.max(scores, axis=-1, keepdims=True)
    p = jnp.exp(scores - m)
    w = p * pl.reciprocal(jnp.sum(p, axis=-1, keepdims=True), approx=True)
    # TODO(synk): attention dropout skipped (module evaluated in eval mode).

    # ctx[h, q, f] = sum_k w[h, q, k] * vh[h, k, f]
    ctx = jax.lax.dot_general(
        w.astype(jnp.bfloat16), vh,
        dimension_numbers=(((2,), (1,)), ((0,), (0,))),
        preferred_element_type=jnp.float32)  # (n_heads, qlen, dph)

    # out[q, e] = sum_h ctx[h] @ wo[h]  -- head-batched out_lin, no unshape relayout.
    out_h = jax.lax.dot_general(
        ctx.astype(jnp.bfloat16), wo_ref[...],
        dimension_numbers=(((2,), (1,)), ((0,), (0,))),
        preferred_element_type=jnp.float32)  # (n_heads, qlen, dim)
    out = jnp.sum(out_h, axis=0) + bo_ref[...]
    out_ref[0] = out.astype(out_ref.dtype)


def multi_head_attention(x, mask, params, n_heads):
    bs, qlen, dim = x.shape
    klen = mask.shape[-1]
    assert dim % n_heads == 0
    dph = dim // n_heads
    wq, bq, wk, bk, wv, bv, wo, bo = params

    # Fold the 1/sqrt(dim_per_head) scale into the Q projection (host side, free).
    scale = 1.0 / math.sqrt(dph)
    wq = wq * scale
    bq = bq * scale

    # bf16 weights for the MXU (accumulation stays f32 in-kernel); f32 biases.
    wq_b = wq.astype(jnp.bfloat16)
    wk_b = wk.astype(jnp.bfloat16)
    wv_b = wv.astype(jnp.bfloat16)
    # out_lin weight pre-split per head: input-feature index = h * dph + f.
    wo_b = wo.reshape(n_heads, dph, dim).astype(jnp.bfloat16)
    bq_f = bq.astype(jnp.float32)
    bk_f = bk.astype(jnp.float32)
    bv_f = bv.astype(jnp.float32)
    bo_f = bo.astype(jnp.float32)

    # Additive mask bias: 0 where attend, -1e30 where masked.  A finite sentinel
    # keeps fully-padded rows NaN-free (they degrade to a uniform distribution).
    mbias = jnp.where(mask.reshape(bs, 1, klen) != 0, 0.0, -1e30).astype(jnp.float32)

    kernel = functools.partial(mha_kernel, n_heads=n_heads)
    full = lambda shape: pl.BlockSpec(shape, lambda b: (0,) * len(shape))

    # TODO(synk): for long sequences add qlen/kv grid axes with online-softmax
    # accumulators (flash-style) so per-step VMEM stays bounded on v7x.
    return pl.pallas_call(
        kernel,
        out_shape=jax.ShapeDtypeStruct((bs, qlen, dim), x.dtype),
        grid_spec=pltpu.PrefetchScalarGridSpec(
            num_scalar_prefetch=0,
            grid=(bs,),
            in_specs=[
                pl.BlockSpec((1, qlen, dim), lambda b: (b, 0, 0)),   # input
                pl.BlockSpec((1, 1, klen), lambda b: (b, 0, 0)),     # additive mask
                full((dim, dim)), full((1, dim)),                    # q_lin (scaled)
                full((dim, dim)), full((1, dim)),                    # k_lin
                full((dim, dim)), full((1, dim)),                    # v_lin
                full((n_heads, dph, dim)), full((1, dim)),           # out_lin (per head)
            ],
            out_specs=pl.BlockSpec((1, qlen, dim), lambda b: (b, 0, 0)),
        ),
        compiler_params=pltpu.CompilerParams(
            dimension_semantics=("parallel",),
            vmem_limit_bytes=64 * 1024 * 1024),
    )(x, mbias, wq_b, bq_f, wk_b, bk_f, wv_b, bv_f, wo_b, bo_f)


def ref_mha(x, mask, params, n_heads):
    """Pure-JAX f32 reference reproducing the PyTorch forward (eval mode)."""
    bs, qlen, dim = x.shape
    dph = dim // n_heads
    wq, bq, wk, bk, wv, bv, wo, bo = params

    def shape(t):
        return t.reshape(bs, qlen, n_heads, dph).transpose(0, 2, 1, 3)

    q = shape(x @ wq + bq[0]) / math.sqrt(dph)
    k = shape(x @ wk + bk[0])
    v = shape(x @ wv + bv[0])
    scores = jnp.einsum('bhqd,bhkd->bhqk', q, k)
    msk = (mask == 0).reshape(bs, 1, 1, qlen)
    scores = jnp.where(msk, -jnp.inf, scores)
    w = jax.nn.softmax(scores.astype(jnp.float32), axis=-1)
    ctx = jnp.einsum('bhqk,bhkd->bhqd', w, v)
    ctx = ctx.transpose(0, 2, 1, 3).reshape(bs, qlen, dim)
    return ctx @ wo + bo[0]


if __name__ == "__main__":
    bs, qlen, dim, n_heads = 2, 8, 32, 4

    key = jax.random.PRNGKey(0)
    keys = jax.random.split(key, 10)
    bound = 1.0 / math.sqrt(dim)

    def u(k, shape):
        return jax.random.uniform(k, shape, jnp.float32, -bound, bound)

    params = (
        u(keys[0], (dim, dim)), u(keys[1], (1, dim)),   # q_lin
        u(keys[2], (dim, dim)), u(keys[3], (1, dim)),   # k_lin
        u(keys[4], (dim, dim)), u(keys[5], (1, dim)),   # v_lin
        u(keys[6], (dim, dim)), u(keys[7], (1, dim)),   # out_lin
    )

    x = jax.random.normal(keys[8], (bs, qlen, dim), jnp.float32)
    lengths = jnp.array([qlen, 5], dtype=jnp.int32)
    mask = (jnp.arange(qlen)[None, :] < lengths[:, None]).astype(jnp.float32)  # (bs, qlen)

    out = multi_head_attention(x, mask, params, n_heads)
    out = jax.block_until_ready(out)

    ref = ref_mha(x, mask, params, n_heads)
    assert out.shape == (bs, qlen, dim)
    # bf16 matmul operands + EUP approx reciprocal => loosened tolerance vs f32 ref.
    assert jnp.allclose(out, ref, atol=3e-2, rtol=3e-2), "mismatch vs reference"

    print("KERNEL_OK")
</pallas_src>

<mosaic_0001>
module attributes {stable_mosaic.version = 11 : i64} {
  func.func @mha_kernel(%arg0: i32, %arg1: memref<1x8x32xf32, #tpu.memory_space<vmem>>, %arg2: memref<1x1x8xf32, #tpu.memory_space<vmem>>, %arg3: memref<32x32xbf16, #tpu.memory_space<vmem>>, %arg4: memref<1x32xf32, #tpu.memory_space<vmem>>, %arg5: memref<32x32xbf16, #tpu.memory_space<vmem>>, %arg6: memref<1x32xf32, #tpu.memory_space<vmem>>, %arg7: memref<32x32xbf16, #tpu.memory_space<vmem>>, %arg8: memref<1x32xf32, #tpu.memory_space<vmem>>, %arg9: memref<4x8x32xbf16, #tpu.memory_space<vmem>>, %arg10: memref<1x32xf32, #tpu.memory_space<vmem>>, %arg11: memref<1x8x32xf32, #tpu.memory_space<vmem>>) attributes {dimension_semantics = [#tpu.dimension_semantics<parallel>], iteration_bounds = array<i64: 2>, scalar_prefetch = 0 : i64, scratch_operands = 0 : i64, tpu.core_type = #tpu.core_type<tc>, window_params = [{transform_indices = @transform_0, window_bounds = array<i64: 1, 8, 32>}, {transform_indices = @transform_1, window_bounds = array<i64: 1, 1, 8>}, {pipeline_mode = #tpu.pipeline_mode<synchronous>, transform_indices = @transform_2, window_bounds = array<i64: 32, 32>}, {pipeline_mode = #tpu.pipeline_mode<synchronous>, transform_indices = @transform_3, window_bounds = array<i64: 1, 32>}, {pipeline_mode = #tpu.pipeline_mode<synchronous>, transform_indices = @transform_4, window_bounds = array<i64: 32, 32>}, {pipeline_mode = #tpu.pipeline_mode<synchronous>, transform_indices = @transform_5, window_bounds = array<i64: 1, 32>}, {pipeline_mode = #tpu.pipeline_mode<synchronous>, transform_indices = @transform_6, window_bounds = array<i64: 32, 32>}, {pipeline_mode = #tpu.pipeline_mode<synchronous>, transform_indices = @transform_7, window_bounds = array<i64: 1, 32>}, {pipeline_mode = #tpu.pipeline_mode<synchronous>, transform_indices = @transform_8, window_bounds = array<i64: 4, 8, 32>}, {pipeline_mode = #tpu.pipeline_mode<synchronous>, transform_indices = @transform_9, window_bounds = array<i64: 1, 32>}, {transform_indices = @transform_10, window_bounds = array<i64: 1, 8, 32>}]} {
    %c0 = arith.constant 0 : index
    %c0_0 = arith.constant 0 : index
    %c0_1 = arith.constant 0 : index
    %0 = vector.load %arg1[%c0, %c0_0, %c0_1] : memref<1x8x32xf32, #tpu.memory_space<vmem>>, vector<1x8x32xf32>
    %1 = vector.shape_cast %0 : vector<1x8x32xf32> to vector<8x32xf32>
    %2 = arith.truncf %1 : vector<8x32xf32> to vector<8x32xbf16>
    %c0_2 = arith.constant 0 : index
    %c0_3 = arith.constant 0 : index
    %c0_4 = arith.constant 0 : index
    %3 = vector.load %arg2[%c0_2, %c0_3, %c0_4] : memref<1x1x8xf32, #tpu.memory_space<vmem>>, vector<1x1x8xf32>
    %4 = vector.shape_cast %3 : vector<1x1x8xf32> to vector<1x8xf32>
    %c0_5 = arith.constant 0 : index
    %c0_6 = arith.constant 0 : index
    %5 = vector.load %arg3[%c0_5, %c0_6] : memref<32x32xbf16, #tpu.memory_space<vmem>>, vector<32x32xbf16>
    %cst = arith.constant dense<0.000000e+00> : vector<8x32xf32>
    %6 = tpu.matmul %2, %5, %cst {dimension_numbers = #tpu.dot_dimension_numbers<[1], [0], [0], [1], [0, 0, 1, 1], [], []>} : vector<8x32xbf16>, vector<32x32xbf16>, vector<8x32xf32> -> vector<8x32xf32>
    %c0_7 = arith.constant 0 : index
    %c0_8 = arith.constant 0 : index
    %7 = vector.load %arg4[%c0_7, %c0_8] : memref<1x32xf32, #tpu.memory_space<vmem>>, vector<1x32xf32>
    %8 = vector.broadcast %7 : vector<1x32xf32> to vector<8x32xf32>
    %9 = arith.addf %6, %8 : vector<8x32xf32>
    %10 = vector.extract_strided_slice %9 {offsets = [0, 0], sizes = [8, 8], strides = [1, 1]} : vector<8x32xf32> to vector<8x8xf32>
    %11 = vector.extract_strided_slice %9 {offsets = [0, 8], sizes = [8, 8], strides = [1, 1]} : vector<8x32xf32> to vector<8x8xf32>
    %12 = vector.extract_strided_slice %9 {offsets = [0, 16], sizes = [8, 8], strides = [1, 1]} : vector<8x32xf32> to vector<8x8xf32>
    %13 = vector.extract_strided_slice %9 {offsets = [0, 24], sizes = [8, 8], strides = [1, 1]} : vector<8x32xf32> to vector<8x8xf32>
    %14 = vector.shape_cast %10 : vector<8x8xf32> to vector<1x8x8xf32>
    %15 = vector.shape_cast %11 : vector<8x8xf32> to vector<1x8x8xf32>
    %16 = vector.shape_cast %12 : vector<8x8xf32> to vector<1x8x8xf32>
    %17 = vector.shape_cast %13 : vector<8x8xf32> to vector<1x8x8xf32>
    %18 = tpu.concatenate %14, %15, %16, %17 in 0 : vector<1x8x8xf32>, vector<1x8x8xf32>, vector<1x8x8xf32>, vector<1x8x8xf32> -> vector<4x8x8xf32>
    %19 = arith.truncf %18 : vector<4x8x8xf32> to vector<4x8x8xbf16>
    %c0_9 = arith.constant 0 : index
    %c0_10 = arith.constant 0 : index
    %20 = vector.load %arg5[%c0_9, %c0_10] : memref<32x32xbf16, #tpu.memory_space<vmem>>, vector<32x32xbf16>
    %cst_11 = arith.constant dense<0.000000e+00> : vector<8x32xf32>
    %21 = tpu.matmul %2, %20, %cst_11 {dimension_numbers = #tpu.dot_dimension_numbers<[1], [0], [0], [1], [0, 0, 1, 1], [], []>} : vector<8x32xbf16>, vector<32x32xbf16>, vector<8x32xf32> -> vector<8x32xf32>
    %c0_12 = arith.constant 0 : index
    %c0_13 = arith.constant 0 : index
    %22 = vector.load %arg6[%c0_12, %c0_13] : memref<1x32xf32, #tpu.memory_space<vmem>>, vector<1x32xf32>
    %23 = vector.broadcast %22 : vector<1x32xf32> to vector<8x32xf32>
    %24 = arith.addf %21, %23 : vector<8x32xf32>
    %25 = vector.extract_strided_slice %24 {offsets = [0, 0], sizes = [8, 8], strides = [1, 1]} : vector<8x32xf32> to vector<8x8xf32>
    %26 = vector.extract_strided_slice %24 {offsets = [0, 8], sizes = [8, 8], strides = [1, 1]} : vector<8x32xf32> to vector<8x8xf32>
    %27 = vector.extract_strided_slice %24 {offsets = [0, 16], sizes = [8, 8], strides = [1, 1]} : vector<8x32xf32> to vector<8x8xf32>
    %28 = vector.extract_strided_slice %24 {offsets = [0, 24], sizes = [8, 8], strides = [1, 1]} : vector<8x32xf32> to vector<8x8xf32>
    %29 = vector.shape_cast %25 : vector<8x8xf32> to vector<1x8x8xf32>
    %30 = vector.shape_cast %26 : vector<8x8xf32> to vector<1x8x8xf32>
    %31 = vector.shape_cast %27 : vector<8x8xf32> to vector<1x8x8xf32>
    %32 = vector.shape_cast %28 : vector<8x8xf32> to vector<1x8x8xf32>
    %33 = tpu.concatenate %29, %30, %31, %32 in 0 : vector<1x8x8xf32>, vector<1x8x8xf32>, vector<1x8x8xf32>, vector<1x8x8xf32> -> vector<4x8x8xf32>
    %34 = arith.truncf %33 : vector<4x8x8xf32> to vector<4x8x8xbf16>
    %c0_14 = arith.constant 0 : index
    %c0_15 = arith.constant 0 : index
    %35 = vector.load %arg7[%c0_14, %c0_15] : memref<32x32xbf16, #tpu.memory_space<vmem>>, vector<32x32xbf16>
    %cst_16 = arith.constant dense<0.000000e+00> : vector<8x32xf32>
    %36 = tpu.matmul %2, %35, %cst_16 {dimension_numbers = #tpu.dot_dimension_numbers<[1], [0], [0], [1], [0, 0, 1, 1], [], []>} : vector<8x32xbf16>, vector<32x32xbf16>, vector<8x32xf32> -> vector<8x32xf32>
    %c0_17 = arith.constant 0 : index
    %c0_18 = arith.constant 0 : index
    %37 = vector.load %arg8[%c0_17, %c0_18] : memref<1x32xf32, #tpu.memory_space<vmem>>, vector<1x32xf32>
    %38 = vector.broadcast %37 : vector<1x32xf32> to vector<8x32xf32>
    %39 = arith.addf %36, %38 : vector<8x32xf32>
    %40 = vector.extract_strided_slice %39 {offsets = [0, 0], sizes = [8, 8], strides = [1, 1]} : vector<8x32xf32> to vector<8x8xf32>
    %41 = vector.extract_strided_slice %39 {offsets = [0, 8], sizes = [8, 8], strides = [1, 1]} : vector<8x32xf32> to vector<8x8xf32>
    %42 = vector.extract_strided_slice %39 {offsets = [0, 16], sizes = [8, 8], strides = [1, 1]} : vector<8x32xf32> to vector<8x8xf32>
    %43 = vector.extract_strided_slice %39 {offsets = [0, 24], sizes = [8, 8], strides = [1, 1]} : vector<8x32xf32> to vector<8x8xf32>
    %44 = vector.shape_cast %40 : vector<8x8xf32> to vector<1x8x8xf32>
    %45 = vector.shape_cast %41 : vector<8x8xf32> to vector<1x8x8xf32>
    %46 = vector.shape_cast %42 : vector<8x8xf32> to vector<1x8x8xf32>
    %47 = vector.shape_cast %43 : vector<8x8xf32> to vector<1x8x8xf32>
    %48 = tpu.concatenate %44, %45, %46, %47 in 0 : vector<1x8x8xf32>, vector<1x8x8xf32>, vector<1x8x8xf32>, vector<1x8x8xf32> -> vector<4x8x8xf32>
    %49 = arith.truncf %48 : vector<4x8x8xf32> to vector<4x8x8xbf16>
    %cst_19 = arith.constant dense<0.000000e+00> : vector<4x8x8xf32>
    %50 = tpu.matmul %19, %34, %cst_19 {dimension_numbers = #tpu.dot_dimension_numbers<[2], [2], [1], [1], [0, 0, 0, 1, 1, 1], [0], [0]>} : vector<4x8x8xbf16>, vector<4x8x8xbf16>, vector<4x8x8xf32> -> vector<4x8x8xf32>
    %51 = vector.shape_cast %4 : vector<1x8xf32> to vector<1x1x8xf32>
    %52 = vector.broadcast %51 : vector<1x1x8xf32> to vector<4x8x8xf32>
    %53 = arith.addf %50, %52 : vector<4x8x8xf32>
    %cst_20 = arith.constant dense<0xFF800000> : vector<4x8xf32>
    %54 = vector.multi_reduction <maximumf>, %53, %cst_20 [2] : vector<4x8x8xf32> to vector<4x8xf32>
    %55 = vector.shape_cast %54 : vector<4x8xf32> to vector<4x8x1xf32>
    %56 = vector.broadcast %55 : vector<4x8x1xf32> to vector<4x8x8xf32>
    %57 = arith.subf %53, %56 : vector<4x8x8xf32>
    %58 = math.exp %57 : vector<4x8x8xf32>
    %cst_21 = arith.constant dense<0.000000e+00> : vector<4x8xf32>
    %59 = vector.multi_reduction <add>, %58, %cst_21 [2] : vector<4x8x8xf32> to vector<4x8xf32>
    %60 = vector.shape_cast %59 : vector<4x8xf32> to vector<4x8x1xf32>
    %61 = tpu.reciprocal %60 {approx = true} : vector<4x8x1xf32> -> vector<4x8x1xf32>
    %62 = vector.broadcast %61 : vector<4x8x1xf32> to vector<4x8x8xf32>
    %63 = arith.mulf %58, %62 : vector<4x8x8xf32>
    %64 = arith.truncf %63 : vector<4x8x8xf32> to vector<4x8x8xbf16>
    %cst_22 = arith.constant dense<0.000000e+00> : vector<4x8x8xf32>
    %65 = tpu.matmul %64, %49, %cst_22 {dimension_numbers = #tpu.dot_dimension_numbers<[2], [1], [1], [2], [0, 0, 0, 1, 1, 2], [0], [0]>} : vector<4x8x8xbf16>, vector<4x8x8xbf16>, vector<4x8x8xf32> -> vector<4x8x8xf32>
    %66 = arith.truncf %65 : vector<4x8x8xf32> to vector<4x8x8xbf16>
    %c0_23 = arith.constant 0 : index
    %c0_24 = arith.constant 0 : index
    %c0_25 = arith.constant 0 : index
    %67 = vector.load %arg9[%c0_23, %c0_24, %c0_25] : memref<4x8x32xbf16, #tpu.memory_space<vmem>>, vector<4x8x32xbf16>
    %cst_26 = arith.constant dense<0.000000e+00> : vector<4x8x32xf32>
    %68 = tpu.matmul %66, %67, %cst_26 {dimension_numbers = #tpu.dot_dimension_numbers<[2], [1], [1], [2], [0, 0, 0, 1, 1, 2], [0], [0]>} : vector<4x8x8xbf16>, vector<4x8x32xbf16>, vector<4x8x32xf32> -> vector<4x8x32xf32>
    %cst_27 = arith.constant dense<0.000000e+00> : vector<8x32xf32>
    %69 = vector.multi_reduction <add>, %68, %cst_27 [0] : vector<4x8x32xf32> to vector<8x32xf32>
    %c0_28 = arith.constant 0 : index
    %c0_29 = arith.constant 0 : index
    %70 = vector.load %arg10[%c0_28, %c0_29] : memref<1x32xf32, #tpu.memory_space<vmem>>, vector<1x32xf32>
    %71 = vector.broadcast %70 : vector<1x32xf32> to vector<8x32xf32>
    %72 = arith.addf %69, %71 : vector<8x32xf32>
    %c0_30 = arith.constant 0 : index
    %c0_31 = arith.constant 0 : index
    %c0_32 = arith.constant 0 : index
    %73 = vector.load %arg11[%c0_30, %c0_31, %c0_32] : memref<1x8x32xf32, #tpu.memory_space<vmem>>, vector<1x8x32xf32>
    %74 = vector.shape_cast %73 : vector<1x8x32xf32> to vector<8x32xf32>
    %75 = vector.shape_cast %72 : vector<8x32xf32> to vector<1x8x32xf32>
    tpu.vector_store %arg11[%c0_30, %c0_31, %c0_32], %75 {strides = array<i32>} : memref<1x8x32xf32, #tpu.memory_space<vmem>>, vector<1x8x32xf32>,
    return
  }
  func.func @transform_0(%arg0: i32) -> (i32, i32, i32) {
    %c0_i32 = arith.constant 0 : i32
    %c0_i32_0 = arith.constant 0 : i32
    %c0_i32_1 = arith.constant 0 : i32
    return %arg0, %c0_i32, %c0_i32_0 : i32, i32, i32
  }
  func.func @transform_1(%arg0: i32) -> (i32, i32, i32) {
    %c0_i32 = arith.constant 0 : i32
    %c0_i32_0 = arith.constant 0 : i32
    %c0_i32_1 = arith.constant 0 : i32
    return %arg0, %c0_i32, %c0_i32_0 : i32, i32, i32
  }
  func.func @transform_2(%arg0: i32) -> (i32, i32) {
    %c0_i32 = arith.constant 0 : i32
    %c0_i32_0 = arith.constant 0 : i32
    %c0_i32_1 = arith.constant 0 : i32
    return %c0_i32, %c0_i32_0 : i32, i32
  }
  func.func @transform_3(%arg0: i32) -> (i32, i32) {
    %c0_i32 = arith.constant 0 : i32
    %c0_i32_0 = arith.constant 0 : i32
    %c0_i32_1 = arith.constant 0 : i32
    return %c0_i32, %c0_i32_0 : i32, i32
  }
  func.func @transform_4(%arg0: i32) -> (i32, i32) {
    %c0_i32 = arith.constant 0 : i32
    %c0_i32_0 = arith.constant 0 : i32
    %c0_i32_1 = arith.constant 0 : i32
    return %c0_i32, %c0_i32_0 : i32, i32
  }
  func.func @transform_5(%arg0: i32) -> (i32, i32) {
    %c0_i32 = arith.constant 0 : i32
    %c0_i32_0 = arith.constant 0 : i32
    %c0_i32_1 = arith.constant 0 : i32
    return %c0_i32, %c0_i32_0 : i32, i32
  }
  func.func @transform_6(%arg0: i32) -> (i32, i32) {
    %c0_i32 = arith.constant 0 : i32
    %c0_i32_0 = arith.constant 0 : i32
    %c0_i32_1 = arith.constant 0 : i32
    return %c0_i32, %c0_i32_0 : i32, i32
  }
  func.func @transform_7(%arg0: i32) -> (i32, i32) {
    %c0_i32 = arith.constant 0 : i32
    %c0_i32_0 = arith.constant 0 : i32
    %c0_i32_1 = arith.constant 0 : i32
    return %c0_i32, %c0_i32_0 : i32, i32
  }
  func.func @transform_8(%arg0: i32) -> (i32, i32, i32) {
    %c0_i32 = arith.constant 0 : i32
    %c0_i32_0 = arith.constant 0 : i32
    %c0_i32_1 = arith.constant 0 : i32
    %c0_i32_2 = arith.constant 0 : i32
    return %c0_i32, %c0_i32_0, %c0_i32_1 : i32, i32, i32
  }
  func.func @transform_9(%arg0: i32) -> (i32, i32) {
    %c0_i32 = arith.constant 0 : i32
    %c0_i32_0 = arith.constant 0 : i32
    %c0_i32_1 = arith.constant 0 : i32
    return %c0_i32, %c0_i32_0 : i32, i32
  }
  func.func @transform_10(%arg0: i32) -> (i32, i32, i32) {
    %c0_i32 = arith.constant 0 : i32
    %c0_i32_0 = arith.constant 0 : i32
    %c0_i32_1 = arith.constant 0 : i32
    return %arg0, %c0_i32, %c0_i32_0 : i32, i32, i32
  }
}

</mosaic_0001>

<llo_original>
// kernel: tpu_custom_call.1
$region0: #{tpu_custom_call.1}
  #allocation0 [shape = 'u32[]', space=smem, size = 0x4, offset = 0x4, fixed_abs, tag = 'smem constant byte address 0x4 - core index']
  #allocation1 [shape = 'u32[144,128]{1,0:T(1,128)}', space=vmem, size = 0x12000, scoped, tag = 'internal scratch']
  %s0 = inlined_call_operand.hbm [shape: f32[2,8,32], index: 0, kind: input, shape index: {}]
  %s1 = inlined_call_operand.hbm [shape: f32[2,1,8], index: 1, kind: input, shape index: {}]
  %s2 = inlined_call_operand.hbm [shape: bf16[32,32], index: 2, kind: input, shape index: {}]
  %s3 = inlined_call_operand.hbm [shape: f32[1,32], index: 3, kind: input, shape index: {}]
  %s4 = inlined_call_operand.hbm [shape: bf16[32,32], index: 4, kind: input, shape index: {}]
  %s5 = inlined_call_operand.hbm [shape: f32[1,32], index: 5, kind: input, shape index: {}]
  %s6 = inlined_call_operand.hbm [shape: bf16[32,32], index: 6, kind: input, shape index: {}]
  %s7 = inlined_call_operand.hbm [shape: f32[1,32], index: 7, kind: input, shape index: {}]
  %s8 = inlined_call_operand.hbm [shape: bf16[4,8,32], index: 8, kind: input, shape index: {}]
  %s9 = inlined_call_operand.hbm [shape: f32[1,32], index: 9, kind: input, shape index: {}]
  %s10 = inlined_call_operand.hbm [shape: f32[2,8,32], index: 10, kind: output, shape index: {}]
  %s11 = sld [smem:[#allocation0]]
  $region113: #{tpu_custom_call.1} parent=0
    _
  %s13 = ssub.s32 1, %s11
  %s14 = scalar_select 0, %s13, %s11
  $region1: #{tpu_custom_call.1} parent=0
    #allocation2 [shape = 'u8[8192]{0}', space=vmem, size = 0x2000, scoped, tag = 'input window, operand 0']
    #allocation3 [shape = 's32[2]{0}', space=sflag, size = 0x8, scoped, tag = 'scoped memory for tpu_custom_call.1']
    #allocation4 [shape = 's32[2]{0}', space=sflag, size = 0x8, scoped, tag = 'scoped memory for tpu_custom_call.1']
    #allocation5 [shape = 'u8[1024]{0}', space=vmem, size = 0x400, scoped, tag = 'input window, operand 1']
    #allocation6 [shape = 's32[2]{0}', space=sflag, size = 0x8, scoped, tag = 'scoped memory for tpu_custom_call.1']
    #allocation7 [shape = 'u8[8192]{0}', space=vmem, size = 0x2000, scoped, tag = 'input window, operand 2, single buffered']
    #allocation8 [shape = 'u8[512]{0}', space=vmem, size = 0x400, scoped, tag = 'input window, operand 3, single buffered']
    #allocation9 [shape = 's32[1]{0}', space=sflag, size = 0x4, scoped, tag = 'scoped memory for tpu_custom_call.1']
    #allocation10 [shape = 'u8[8192]{0}', space=vmem, size = 0x2000, scoped, tag = 'input window, operand 4, single buffered']
    #allocation11 [shape = 'u8[512]{0}', space=vmem, size = 0x400, scoped, tag = 'input window, operand 5, single buffered']
    #allocation12 [shape = 's32[1]{0}', space=sflag, size = 0x4, scoped, tag = 'scoped memory for tpu_custom_call.1']
    #allocation13 [shape = 'u8[8192]{0}', space=vmem, size = 0x2000, scoped, tag = 'input window, operand 6, single buffered']
    #allocation14 [shape = 'u8[512]{0}', space=vmem, size = 0x400, scoped, tag = 'input window, operand 7, single buffered']
    #allocation15 [shape = 's32[1]{0}', space=sflag, size = 0x4, scoped, tag = 'scoped memory for tpu_custom_call.1']
    #allocation16 [shape = 'u8[8192]{0}', space=vmem, size = 0x2000, scoped, tag = 'input window, operand 8, single buffered']
    #allocation17 [shape = 'u8[512]{0}', space=vmem, size = 0x400, scoped, tag = 'input window, operand 9, single buffered']
    #allocation18 [shape = 's32[1]{0}', space=sflag, size = 0x4, scoped, tag = 'scoped memory for tpu_custom_call.1']
    #allocation19 [shape = 'u8[8192]{0}', space=vmem, size = 0x2000, scoped, tag = 'output window, operand 0']
    %15 = vsyncpa [#allocation3], 0
    %s16 = scalar_lea.sflag [#allocation3], 1
    %17 = vsyncpa %s16, 0
    %18 = vsyncpa [#allocation6], 0
    %s19 = scalar_lea.sflag [#allocation6], 1
    %20 = vsyncpa %s19, 0
    %21 = vsyncpa [#allocation9], 0
    %22 = vsyncpa [#allocation12], 0
    %23 = vsyncpa [#allocation15], 0
    %24 = vsyncpa [#allocation18], 0
    %25 = vsyncpa [#allocation4], 0
    %s26 = scalar_lea.sflag [#allocation4], 1
    %27 = vsyncpa %s26, 0
    loop: start=0, step=1, limit=4
    $region2: #{tpu_custom_call.1} parent=1 // loop_pre_header
      _
    $region3: #{tpu_custom_call.1} parent=1 // loop_header
      %s29 = sphi 0, %s33
      %p30 = scmp.ge.s32.totalorder %s29, 4
      %s39 = sphi 0, %s41
      %s42 = sphi 0, %s39
      %s43 = sphi 0, %s42
      %s59 = sphi 0, %s43
      %s65 = sphi 0, %s67
      %s68 = sphi 0, %s65
      %s69 = sphi 0, %s68
      %s85 = sphi 0, %s69
      %s89 = sphi 0, %s89
      %s91 = sphi 0, %s89
      %s92 = sphi 0, %s91
      %s106 = sphi 0, %s92
      %s110 = sphi 0, %s110
      %s112 = sphi 0, %s110
      %s113 = sphi 0, %s112
      %s127 = sphi 0, %s113
      %s131 = sphi 0, %s131
      %s133 = sphi 0, %s131
      %s134 = sphi 0, %s133
      %s148 = sphi 0, %s134
      %s152 = sphi 0, %s152
      %s154 = sphi 0, %s152
      %s155 = sphi 0, %s154
      %s169 = sphi 0, %s155
      %s173 = sphi 0, %s173
      %s175 = sphi 0, %s173
      %s176 = sphi 0, %s175
      %s190 = sphi 0, %s176
      %s194 = sphi 0, %s194
      %s196 = sphi 0, %s194
      %s197 = sphi 0, %s196
      %s211 = sphi 0, %s197
      %s215 = sphi 0, %s215
      %s217 = sphi 0, %s215
      %s218 = sphi 0, %s217
      %s232 = sphi 0, %s218
      %s236 = sphi 0, %s236
      %s238 = sphi 0, %s236
      %s239 = sphi 0, %s238
      %s253 = sphi 0, %s239
      %s259 = sphi 0, %s261
      %s262 = sphi 0, %s259
      %s263 = sphi 0, %s262
      %s279 = sphi 0, %s263
    $region4: #{tpu_custom_call.1} parent=1 // loop_header_branch
      %32 = sbr.rel (%p30) target = $region8
    $region5: #{tpu_custom_call.1} parent=1 // loop_body
      %s34 = ssub.s32 %s29, 1
      %s35 = ssub.s32 %s29, 2
      %s36 = sadd.s32 %s29, 1
      %s37 = ssub.s32 %s29, %s36
      %p38 = scmp.eq.s32.totalorder %s37, 0
      %s40 = sadd.s32 %s39, 1
      %s41 = scalar_select %p38, %s39, %s40
      %p44 = pneg %p38
      %p45 = scmp.eq.s32.totalorder %s29, 1
      %p46 = por %p44, %p45
      %p47 = scmp.ne.s32.totalorder %s39, %s42
      %p48 = scmp.eq.s32.totalorder %s29, 0
      %p49 = por %p47, %p48
      %p50 = scmp.ne.s32.totalorder %s39, %s42
      %p51 = scmp.eq.s32.totalorder %s34, 1
      %p52 = por %p50, %p51
      %p53 = scmp.ne.s32.totalorder %s42, %s43
      %p54 = scmp.eq.s32.totalorder %s34, 0
      %p55 = por %p53, %p54
      %p56 = scmp.ne.s32.totalorder %s42, %s43
      %p57 = scmp.eq.s32.totalorder %s35, 1
      %p58 = por %p56, %p57
      %p60 = scmp.ne.s32.totalorder %s43, %s59
      %p61 = scmp.eq.s32.totalorder %s35, 0
      %p62 = por %p60, %p61
      %s63 = ssub.s32 %s29, %s36
      %p64 = scmp.eq.s32.totalorder %s63, 0
      %s66 = sadd.s32 %s65, 1
      %s67 = scalar_select %p64, %s65, %s66
      %p70 = pneg %p64
      %p71 = scmp.eq.s32.totalorder %s29, 1
      %p72 = por %p70, %p71
      %p73 = scmp.ne.s32.totalorder %s65, %s68
      %p74 = scmp.eq.s32.totalorder %s29, 0
      %p75 = por %p73, %p74
      %p76 = scmp.ne.s32.totalorder %s65, %s68
      %p77 = scmp.eq.s32.totalorder %s34, 1
      %p78 = por %p76, %p77
      %p79 = scmp.ne.s32.totalorder %s68, %s69
      %p80 = scmp.eq.s32.totalorder %s34, 0
      %p81 = por %p79, %p80
      %p82 = scmp.ne.s32.totalorder %s68, %s69
      %p83 = scmp.eq.s32.totalorder %s35, 1
      %p84 = por %p82, %p83
      %p86 = scmp.ne.s32.totalorder %s69, %s85
      %p87 = scmp.eq.s32.totalorder %s35, 0
      %p88 = por %p86, %p87
      %s90 = sadd.s32 %s89, 1
      %p93 = scmp.eq.s32.totalorder %s29, 1
      %p94 = scmp.ne.s32.totalorder %s89, %s91
      %p95 = scmp.eq.s32.totalorder %s29, 0
      %p96 = por %p94, %p95
      %p97 = scmp.ne.s32.totalorder %s89, %s91
      %p98 = scmp.eq.s32.totalorder %s34, 1
      %p99 = por %p97, %p98
      %p100 = scmp.ne.s32.totalorder %s91, %s92
      %p101 = scmp.eq.s32.totalorder %s34, 0
      %p102 = por %p100, %p101
      %p103 = scmp.ne.s32.totalorder %s91, %s92
      %p104 = scmp.eq.s32.totalorder %s35, 1
      %p105 = por %p103, %p104
      %p107 = scmp.ne.s32.totalorder %s92, %s106
      %p108 = scmp.eq.s32.totalorder %s35, 0
      %p109 = por %p107, %p108
      %s111 = sadd.s32 %s110, 1
      %p114 = scmp.eq.s32.totalorder %s29, 1
      %p115 = scmp.ne.s32.totalorder %s110, %s112
      %p116 = scmp.eq.s32.totalorder %s29, 0
      %p117 = por %p115, %p116
      %p118 = scmp.ne.s32.totalorder %s110, %s112
      %p119 = scmp.eq.s32.totalorder %s34, 1
      %p120 = por %p118, %p119
      %p121 = scmp.ne.s32.totalorder %s112, %s113
      %p122 = scmp.eq.s32.totalorder %s34, 0
      %p123 = por %p121, %p122
      %p124 = scmp.ne.s32.totalorder %s112, %s113
      %p125 = scmp.eq.s32.totalorder %s35, 1
      %p126 = por %p124, %p125
      %p128 = scmp.ne.s32.totalorder %s113, %s127
      %p129 = scmp.eq.s32.totalorder %s35, 0
      %p130 = por %p128, %p129
      %s132 = sadd.s32 %s131, 1
      %p135 = scmp.eq.s32.totalorder %s29, 1
      %p136 = scmp.ne.s32.totalorder %s131, %s133
      %p137 = scmp.eq.s32.totalorder %s29, 0
      %p138 = por %p136, %p137
      %p139 = scmp.ne.s32.totalorder %s131, %s133
      %p140 = scmp.eq.s32.totalorder %s34, 1
      %p141 = por %p139, %p140
      %p142 = scmp.ne.s32.totalorder %s133, %s134
      %p143 = scmp.eq.s32.totalorder %s34, 0
      %p144 = por %p142, %p143
      %p145 = scmp.ne.s32.totalorder %s133, %s134
      %p146 = scmp.eq.s32.totalorder %s35, 1
      %p147 = por %p145, %p146
      %p149 = scmp.ne.s32.totalorder %s134, %s148
      %p150 = scmp.eq.s32.totalorder %s35, 0
      %p151 = por %p149, %p150
      %s153 = sadd.s32 %s152, 1
      %p156 = scmp.eq.s32.totalorder %s29, 1
      %p157 = scmp.ne.s32.totalorder %s152, %s154
      %p158 = scmp.eq.s32.totalorder %s29, 0
      %p159 = por %p157, %p158
      %p160 = scmp.ne.s32.totalorder %s152, %s154
      %p161 = scmp.eq.s32.totalorder %s34, 1
      %p162 = por %p160, %p161
      %p163 = scmp.ne.s32.totalorder %s154, %s155
      %p164 = scmp.eq.s32.totalorder %s34, 0
      %p165 = por %p163, %p164
      %p166 = scmp.ne.s32.totalorder %s154, %s155
      %p167 = scmp.eq.s32.totalorder %s35, 1
      %p168 = por %p166, %p167
      %p170 = scmp.ne.s32.totalorder %s155, %s169
      %p171 = scmp.eq.s32.totalorder %s35, 0
      %p172 = por %p170, %p171
      %s174 = sadd.s32 %s173, 1
      %p177 = scmp.eq.s32.totalorder %s29, 1
      %p178 = scmp.ne.s32.totalorder %s173, %s175
      %p179 = scmp.eq.s32.totalorder %s29, 0
      %p180 = por %p178, %p179
      %p181 = scmp.ne.s32.totalorder %s173, %s175
      %p182 = scmp.eq.s32.totalorder %s34, 1
      %p183 = por %p181, %p182
      %p184 = scmp.ne.s32.totalorder %s175, %s176
      %p185 = scmp.eq.s32.totalorder %s34, 0
      %p186 = por %p184, %p185
      %p187 = scmp.ne.s32.totalorder %s175, %s176
      %p188 = scmp.eq.s32.totalorder %s35, 1
      %p189 = por %p187, %p188
      %p191 = scmp.ne.s32.totalorder %s176, %s190
      %p192 = scmp.eq.s32.totalorder %s35, 0
      %p193 = por %p191, %p192
      %s195 = sadd.s32 %s194, 1
      %p198 = scmp.eq.s32.totalorder %s29, 1
      %p199 = scmp.ne.s32.totalorder %s194, %s196
      %p200 = scmp.eq.s32.totalorder %s29, 0
      %p201 = por %p199, %p200
      %p202 = scmp.ne.s32.totalorder %s194, %s196
      %p203 = scmp.eq.s32.totalorder %s34, 1
      %p204 = por %p202, %p203
      %p205 = scmp.ne.s32.totalorder %s196, %s197
      %p206 = scmp.eq.s32.totalorder %s34, 0
      %p207 = por %p205, %p206
      %p208 = scmp.ne.s32.totalorder %s196, %s197
      %p209 = scmp.eq.s32.totalorder %s35, 1
      %p210 = por %p208, %p209
      %p212 = scmp.ne.s32.totalorder %s197, %s211
      %p213 = scmp.eq.s32.totalorder %s35, 0
      %p214 = por %p212, %p213
      %s216 = sadd.s32 %s215, 1
      %p219 = scmp.eq.s32.totalorder %s29, 1
      %p220 = scmp.ne.s32.totalorder %s215, %s217
      %p221 = scmp.eq.s32.totalorder %s29, 0
      %p222 = por %p220, %p221
      %p223 = scmp.ne.s32.totalorder %s215, %s217
      %p224 = scmp.eq.s32.totalorder %s34, 1
      %p225 = por %p223, %p224
      %p226 = scmp.ne.s32.totalorder %s217, %s218
      %p227 = scmp.eq.s32.totalorder %s34, 0
      %p228 = por %p226, %p227
      %p229 = scmp.ne.s32.totalorder %s217, %s218
      %p230 = scmp.eq.s32.totalorder %s35, 1
      %p231 = por %p229, %p230
      %p233 = scmp.ne.s32.totalorder %s218, %s232
      %p234 = scmp.eq.s32.totalorder %s35, 0
      %p235 = por %p233, %p234
      %s237 = sadd.s32 %s236, 1
      %p240 = scmp.eq.s32.totalorder %s29, 1
      %p241 = scmp.ne.s32.totalorder %s236, %s238
      %p242 = scmp.eq.s32.totalorder %s29, 0
      %p243 = por %p241, %p242
      %p244 = scmp.ne.s32.totalorder %s236, %s238
      %p245 = scmp.eq.s32.totalorder %s34, 1
      %p246 = por %p244, %p245
      %p247 = scmp.ne.s32.totalorder %s238, %s239
      %p248 = scmp.eq.s32.totalorder %s34, 0
      %p249 = por %p247, %p248
      %p250 = scmp.ne.s32.totalorder %s238, %s239
      %p251 = scmp.eq.s32.totalorder %s35, 1
      %p252 = por %p250, %p251
      %p254 = scmp.ne.s32.totalorder %s239, %s253
      %p255 = scmp.eq.s32.totalorder %s35, 0
      %p256 = por %p254, %p255
      %s257 = ssub.s32 %s29, %s36
      %p258 = scmp.eq.s32.totalorder %s257, 0
      %s260 = sadd.s32 %s259, 1
      %s261 = scalar_select %p258, %s259, %s260
      %p264 = pneg %p258
      %p265 = scmp.eq.s32.totalorder %s29, 1
      %p266 = por %p264, %p265
      %p267 = scmp.ne.s32.totalorder %s259, %s262
      %p268 = scmp.eq.s32.totalorder %s29, 0
      %p269 = por %p267, %p268
      %p270 = scmp.ne.s32.totalorder %s259, %s262
      %p271 = scmp.eq.s32.totalorder %s34, 1
      %p272 = por %p270, %p271
      %p273 = scmp.ne.s32.totalorder %s262, %s263
      %p274 = scmp.eq.s32.totalorder %s34, 0
      %p275 = por %p273, %p274
      %p276 = scmp.ne.s32.totalorder %s262, %s263
      %p277 = scmp.eq.s32.totalorder %s35, 1
      %p278 = por %p276, %p277
      %p280 = scmp.ne.s32.totalorder %s263, %s279
      %p281 = scmp.eq.s32.totalorder %s35, 0
      %p282 = por %p280, %p281
      %p283 = scmp.le.s32.totalorder 1, %s29
      %p284 = scmp.lt.s32.totalorder %s29, 3
      %p285 = pnand %p283, %p284
      %p286 = pneg %p285
      // Predicated region
      $region9: #{tpu_custom_call.1} parent=5 // pred_check
        _
      $region10: #{tpu_custom_call.1} parent=5 // pred_check_branch
        %288 = sbr.rel (%p285) target = $region12
      $region11: #{tpu_custom_call.1} parent=5 // pred_region
        %s289 = ssub.s32 %s29, 1
        // Predicated region
        $region13: #{tpu_custom_call.1} parent=11 // pred_check
          %p290 = pneg %p102
        $region14: #{tpu_custom_call.1} parent=11 // pred_check_branch
          %292 = sbr.rel (%p290) target = $region16
        $region15: #{tpu_custom_call.1} parent=11 // pred_region
          %s294 = ssub.s32 256, 256
          %295 = vsyncadd [#allocation6], %s294
          %s296 = sshll.u32 [#allocation7], 4
          %s297 = int_to_ptr.vmem [resolvable:$true] %s296
          %302 = dma.hbm_to_vmem [thread:$0]  %s2, 256, %s297, [#allocation6], 64, 64, 4
        $region16: #{tpu_custom_call.1} parent=11 // pred_fallthru
          _
        // Predicated region
        $region17: #{tpu_custom_call.1} parent=11 // pred_check
          %p303 = pneg %p123
        $region18: #{tpu_custom_call.1} parent=11 // pred_check_branch
          %305 = sbr.rel (%p303) target = $region20
        $region19: #{tpu_custom_call.1} parent=11 // pred_region
          %s307 = ssub.s32 16, 16
          %308 = vsyncadd [#allocation9], %s307
          %s310 = sshll.u32 [#allocation8], 4
          %s311 = int_to_ptr.vmem [resolvable:$true] %s310
          %313 = dma.hbm_to_vmem [thread:$0]  %s3, 16, %s311, [#allocation9]
        $region20: #{tpu_custom_call.1} parent=11 // pred_fallthru
          _
        // Predicated region
        $region21: #{tpu_custom_call.1} parent=11 // pred_check
          %p314 = pneg %p144
        $region22: #{tpu_custom_call.1} parent=11 // pred_check_branch
          %316 = sbr.rel (%p314) target = $region24
        $region23: #{tpu_custom_call.1} parent=11 // pred_region
          %s318 = ssub.s32 256, 256
          %319 = vsyncadd [#allocation9], %s318
          %s320 = sshll.u32 [#allocation10], 4
          %s321 = int_to_ptr.vmem [resolvable:$true] %s320
          %326 = dma.hbm_to_vmem [thread:$0]  %s4, 256, %s321, [#allocation9], 64, 64, 4
        $region24: #{tpu_custom_call.1} parent=11 // pred_fallthru
          _
        // Predicated region
        $region25: #{tpu_custom_call.1} parent=11 // pred_check
          %p327 = pneg %p165
        $region26: #{tpu_custom_call.1} parent=11 // pred_check_branch
          %329 = sbr.rel (%p327) target = $region28
        $region27: #{tpu_custom_call.1} parent=11 // pred_region
          %s331 = ssub.s32 16, 16
          %332 = vsyncadd [#allocation12], %s331
          %s334 = sshll.u32 [#allocation11], 4
          %s335 = int_to_ptr.vmem [resolvable:$true] %s334
          %337 = dma.hbm_to_vmem [thread:$0]  %s5, 16, %s335, [#allocation12]
        $region28: #{tpu_custom_call.1} parent=11 // pred_fallthru
          _
        // Predicated region
        $region29: #{tpu_custom_call.1} parent=11 // pred_check
          %p338 = pneg %p186
        $region30: #{tpu_custom_call.1} parent=11 // pred_check_branch
          %340 = sbr.rel (%p338) target = $region32
        $region31: #{tpu_custom_call.1} parent=11 // pred_region
          %s342 = ssub.s32 256, 256
          %343 = vsyncadd [#allocation12], %s342
          %s344 = sshll.u32 [#allocation13], 4
          %s345 = int_to_ptr.vmem [resolvable:$true] %s344
          %350 = dma.hbm_to_vmem [thread:$0]  %s6, 256, %s345, [#allocation12], 64, 64, 4
        $region32: #{tpu_custom_call.1} parent=11 // pred_fallthru
          _
        // Predicated region
        $region33: #{tpu_custom_call.1} parent=11 // pred_check
          %p351 = pneg %p207
        $region34: #{tpu_custom_call.1} parent=11 // pred_check_branch
          %353 = sbr.rel (%p351) target = $region36
        $region35: #{tpu_custom_call.1} parent=11 // pred_region
          %s355 = ssub.s32 16, 16
          %356 = vsyncadd [#allocation15], %s355
          %s358 = sshll.u32 [#allocation14], 4
          %s359 = int_to_ptr.vmem [resolvable:$true] %s358
          %361 = dma.hbm_to_vmem [thread:$0]  %s7, 16, %s359, [#allocation15]
        $region36: #{tpu_custom_call.1} parent=11 // pred_fallthru
          _
        // Predicated region
        $region37: #{tpu_custom_call.1} parent=11 // pred_check
          %p362 = pneg %p228
        $region38: #{tpu_custom_call.1} parent=11 // pred_check_branch
          %364 = sbr.rel (%p362) target = $region40
        $region39: #{tpu_custom_call.1} parent=11 // pred_region
          %s366 = ssub.s32 256, 256
          %367 = vsyncadd [#allocation15], %s366
          %s368 = sshll.u32 [#allocation16], 4
          %s369 = int_to_ptr.vmem [resolvable:$true] %s368
          %374 = dma.hbm_to_vmem [thread:$0]  %s8, 256, %s369, [#allocation15], 64, 64, 4
        $region40: #{tpu_custom_call.1} parent=11 // pred_fallthru
          _
        // Predicated region
        $region41: #{tpu_custom_call.1} parent=11 // pred_check
          %p375 = pneg %p249
        $region42: #{tpu_custom_call.1} parent=11 // pred_check_branch
          %377 = sbr.rel (%p375) target = $region44
        $region43: #{tpu_custom_call.1} parent=11 // pred_region
          %s379 = ssub.s32 16, 16
          %380 = vsyncadd [#allocation18], %s379
          %s382 = sshll.u32 [#allocation17], 4
          %s383 = int_to_ptr.vmem [resolvable:$true] %s382
          %385 = dma.hbm_to_vmem [thread:$0]  %s9, 16, %s383, [#allocation18]
        $region44: #{tpu_custom_call.1} parent=11 // pred_fallthru
          _
      $region12: #{tpu_custom_call.1} parent=5 // pred_fallthru
        _
      %p386 = scmp.lt.s32.totalorder %s29, 2
      // Predicated region
      $region45: #{tpu_custom_call.1} parent=5 // pred_check
        %p387 = pneg %p386
      $region46: #{tpu_custom_call.1} parent=5 // pred_check_branch
        %389 = sbr.rel (%p387) target = $region48
      $region47: #{tpu_custom_call.1} parent=5 // pred_region
        // Predicated region
        $region49: #{tpu_custom_call.1} parent=47 // pred_check
          %p390 = pneg %p49
        $region50: #{tpu_custom_call.1} parent=47 // pred_check_branch
          %392 = sbr.rel (%p390) target = $region52
        $region51: #{tpu_custom_call.1} parent=47 // pred_region
          %s393 = sand.u32 %s39, 1
          %s394 = scalar_lea.sflag [#allocation3], %s393
          %s395 = sand.u32 %s39, 1
          %s396 = smul.addr %s395, 8
          %s397 = scalar_lea.vmem [#allocation2], %s396
          %s399 = ssub.s32 128, 128
          %400 = vsyncadd %s394, %s399
          %s401 = smul.addr %s29, 128
          %s402 = scalar_lea.hbm %s0, %s401
          %s404 = sshll.u32 %s397, 4
          %s405 = int_to_ptr.vmem [resolvable:$true] %s404
          %407 = dma.hbm_to_vmem [thread:$0]  %s402, 128, %s405, %s394
        $region52: #{tpu_custom_call.1} parent=47 // pred_fallthru
          _
        // Predicated region
        $region53: #{tpu_custom_call.1} parent=47 // pred_check
          %p408 = pneg %p75
        $region54: #{tpu_custom_call.1} parent=47 // pred_check_branch
          %410 = sbr.rel (%p408) target = $region56
        $region55: #{tpu_custom_call.1} parent=47 // pred_region
          %s411 = sand.u32 %s29, 1
          %s412 = scalar_lea.sflag [#allocation6], %s411
          %s413 = sand.u32 %s65, 1
          %s414 = scalar_lea.vmem [#allocation5], %s413
          %s416 = ssub.s32 16, 16
          %417 = vsyncadd %s412, %s416
          %s418 = smul.addr %s29, 16
          %s419 = scalar_lea.hbm %s1, %s418
          %s421 = sshll.u32 %s414, 4
          %s422 = int_to_ptr.vmem [resolvable:$true] %s421
          %424 = dma.hbm_to_vmem [thread:$0]  %s419, 16, %s422, %s412
        $region56: #{tpu_custom_call.1} parent=47 // pred_fallthru
          _
      $region48: #{tpu_custom_call.1} parent=5 // pred_fallthru
        _
      %p425 = scmp.le.s32.totalorder 1, %s29
      %p426 = scmp.lt.s32.totalorder %s29, 3
      %p427 = pnand %p425, %p426
      %p428 = pneg %p427
      // Predicated region
      $region57: #{tpu_custom_call.1} parent=5 // pred_check
        _
      $region58: #{tpu_custom_call.1} parent=5 // pred_check_branch
        %430 = sbr.rel (%p427) target = $region60
      $region59: #{tpu_custom_call.1} parent=5 // pred_region
        %s431 = ssub.s32 %s29, 1
        %s432 = sand.u32 %s42, 1
        %s433 = scalar_lea.sflag [#allocation3], %s432
        %s434 = sand.u32 %s42, 1
        %s435 = smul.addr %s434, 8
        %s436 = scalar_lea.vmem [#allocation2], %s435
        // Predicated region
        $region61: #{tpu_custom_call.1} parent=59 // pred_check
          %p437 = pneg %p55
        $region62: #{tpu_custom_call.1} parent=59 // pred_check_branch
          %439 = sbr.rel (%p437) target = $region64
        $region63: #{tpu_custom_call.1} parent=59 // pred_region
          %440 = dma.done %s433, 128
        $region64: #{tpu_custom_call.1} parent=59 // pred_fallthru
          _
        %s441 = sand.u32 %s34, 1
        %s442 = scalar_lea.sflag [#allocation6], %s441
        %s443 = sand.u32 %s68, 1
        %s444 = scalar_lea.vmem [#allocation5], %s443
        // Predicated region
        $region65: #{tpu_custom_call.1} parent=59 // pred_check
          %p445 = pneg %p81
        $region66: #{tpu_custom_call.1} parent=59 // pred_check_branch
          %447 = sbr.rel (%p445) target = $region68
        $region67: #{tpu_custom_call.1} parent=59 // pred_region
          %448 = dma.done %s442, 16
        $region68: #{tpu_custom_call.1} parent=59 // pred_fallthru
          _
        // Predicated region
        $region69: #{tpu_custom_call.1} parent=59 // pred_check
          %p449 = pneg %p102
        $region70: #{tpu_custom_call.1} parent=59 // pred_check_branch
          %451 = sbr.rel (%p449) target = $region72
        $region71: #{tpu_custom_call.1} parent=59 // pred_region
          %452 = dma.done [#allocation6], 256
        $region72: #{tpu_custom_call.1} parent=59 // pred_fallthru
          _
        // Predicated region
        $region73: #{tpu_custom_call.1} parent=59 // pred_check
          %p453 = pneg %p123
        $region74: #{tpu_custom_call.1} parent=59 // pred_check_branch
          %455 = sbr.rel (%p453) target = $region76
        $region75: #{tpu_custom_call.1} parent=59 // pred_region
          %456 = dma.done [#allocation9], 16
        $region76: #{tpu_custom_call.1} parent=59 // pred_fallthru
          _
        // Predicated region
        $region77: #{tpu_custom_call.1} parent=59 // pred_check
          %p457 = pneg %p144
        $region78: #{tpu_custom_call.1} parent=59 // pred_check_branch
          %459 = sbr.rel (%p457) target = $region80
        $region79: #{tpu_custom_call.1} parent=59 // pred_region
          %460 = dma.done [#allocation9], 256
        $region80: #{tpu_custom_call.1} parent=59 // pred_fallthru
          _
        // Predicated region
        $region81: #{tpu_custom_call.1} parent=59 // pred_check
          %p461 = pneg %p165
        $region82: #{tpu_custom_call.1} parent=59 // pred_check_branch
          %463 = sbr.rel (%p461) target = $region84
        $region83: #{tpu_custom_call.1} parent=59 // pred_region
          %464 = dma.done [#allocation12], 16
        $region84: #{tpu_custom_call.1} parent=59 // pred_fallthru
          _
        // Predicated region
        $region85: #{tpu_custom_call.1} parent=59 // pred_check
          %p465 = pneg %p186
        $region86: #{tpu_custom_call.1} parent=59 // pred_check_branch
          %467 = sbr.rel (%p465) target = $region88
        $region87: #{tpu_custom_call.1} parent=59 // pred_region
          %468 = dma.done [#allocation12], 256
        $region88: #{tpu_custom_call.1} parent=59 // pred_fallthru
          _
        // Predicated region
        $region89: #{tpu_custom_call.1} parent=59 // pred_check
          %p469 = pneg %p207
        $region90: #{tpu_custom_call.1} parent=59 // pred_check_branch
          %471 = sbr.rel (%p469) target = $region92
        $region91: #{tpu_custom_call.1} parent=59 // pred_region
          %472 = dma.done [#allocation15], 16
        $region92: #{tpu_custom_call.1} parent=59 // pred_fallthru
          _
        // Predicated region
        $region93: #{tpu_custom_call.1} parent=59 // pred_check
          %p473 = pneg %p228
        $region94: #{tpu_custom_call.1} parent=59 // pred_check_branch
          %475 = sbr.rel (%p473) target = $region96
        $region95: #{tpu_custom_call.1} parent=59 // pred_region
          %476 = dma.done [#allocation15], 256
        $region96: #{tpu_custom_call.1} parent=59 // pred_fallthru
          _
        // Predicated region
        $region97: #{tpu_custom_call.1} parent=59 // pred_check
          %p477 = pneg %p249
        $region98: #{tpu_custom_call.1} parent=59 // pred_check_branch
          %479 = sbr.rel (%p477) target = $region100
        $region99: #{tpu_custom_call.1} parent=59 // pred_region
          %480 = dma.done [#allocation18], 16
        $region100: #{tpu_custom_call.1} parent=59 // pred_fallthru
          _
        %s481 = sand.u32 %s42, 1
        %s482 = scalar_lea.sflag [#allocation3], %s481
        %s483 = sand.u32 %s42, 1
        %s484 = smul.addr %s483, 8
        %s485 = scalar_lea.vmem [#allocation2], %s484
        %p486 = pneg %p55
        %p487 = pneg %p52
        %s488 = sand.u32 %s34, 1
        %s489 = scalar_lea.sflag [#allocation6], %s488
        %s490 = sand.u32 %s68, 1
        %s491 = scalar_lea.vmem [#allocation5], %s490
        %p492 = pneg %p81
        %p493 = pneg %p78
        %p494 = pneg %p102
        %p495 = pneg %p99
        %p496 = pneg %p123
        %p497 = pneg %p120
        %p498 = pneg %p144
        %p499 = pneg %p141
        %p500 = pneg %p165
        %p501 = pneg %p162
        %p502 = pneg %p186
        %p503 = pneg %p183
        %p504 = pneg %p207
        %p505 = pneg %p204
        %p506 = pneg %p228
        %p507 = pneg %p225
        %p508 = pneg %p249
        %p509 = pneg %p246
        %p510 = pneg %p275
        %p511 = pneg %p272
        %s512 = sand.u32 %s262, 1
        %s513 = scalar_lea.sflag [#allocation4], %s512
        %s514 = sand.u32 %s262, 1
        %s515 = smul.addr %s514, 8
        %s516 = scalar_lea.vmem [#allocation19], %s515
        %v518 = vld [vmem:[%s436] sm:$0xff]
        %v519 = vpack.c.bf16 %v518, %v518
        %v520 = vld [vmem:[%s444] sm:$0x1]
        %v521 = vld [vmem:[#allocation7] sm:$0xf]
        %v522 = vld [vmem:[#allocation7 + $0x4] sm:$0xf]
        %v523 = vld [vmem:[#allocation7 + $0x8] sm:$0xf]
        %v524 = vld [vmem:[#allocation7 + $0xc] sm:$0xf]
        %v525 = vld [vmem:[#allocation8] sm:$0x1]
        %v527 = vlaneseq
        %v528 = vshrl.u32 %v527, 7
        %v529 = vsub.s32 0, %v528
        %v530 = vrot.slane %v525, %v529
        %v536 = vunpack.c.l.b16 %v521
        %v537 = vunpack.c.l.b16 %v522
        %v538 = vunpack.c.l.b16 %v523
        %v539 = vunpack.c.l.b16 %v524
        %v540 = vpack.c.b16 %v537, %v536
        %v541 = vpack.c.b16 %v539, %v538
        %vm544 = vcmask 261120
        %v546 = vsel %vm544, %v519, 0
        %548 = vmatprep.subr.bf16.mxu0 0
        %549 = vmatpush1.bf16.msra.mxu0 %v540
        %550 = vmatprep.subr.bf16.mxu0 0
        %551 = vmatpush1.bf16.msra.mxu0 %v541
        %552 = vmatprep.subr.bf16.mxu0 0
        %553 = vmatpush1.bf16.msra.mxu0 0
        %554 = vmatprep.subr.bf16.mxu0 0
        %555 = vmatpush1.bf16.msra.mxu0 0
        %556 = vmatprep.subr.bf16.mxu0 0
        %557 = vmatpush1.bf16.msra.mxu0 0
        %558 = vmatprep.subr.bf16.mxu0 0
        %559 = vmatpush1.bf16.msra.mxu0 0
        %560 = vmatprep.subr.bf16.mxu0 0
        %561 = vmatpush1.bf16.msra.mxu0 0
        %562 = vmatprep.subr.bf16.mxu0 0
        %563 = vmatpush1.bf16.msra.mxu0 0
        %564 = vmatprep.subr.bf16.mxu0 0
        %565 = vmatpush1.bf16.msra.mxu0 0
        %566 = vmatprep.subr.bf16.mxu0 0
        %567 = vmatpush1.bf16.msra.mxu0 0
        %568 = vmatprep.subr.bf16.mxu0 0
        %569 = vmatpush1.bf16.msra.mxu0 0
        %570 = vmatprep.subr.bf16.mxu0 0
        %571 = vmatpush1.bf16.msra.mxu0 0
        %572 = vmatprep.subr.bf16.mxu0 0
        %573 = vmatpush1.bf16.msra.mxu0 0
        %574 = vmatprep.subr.bf16.mxu0 0
        %575 = vmatpush1.bf16.msra.mxu0 0
        %576 = vmatprep.subr.bf16.mxu0 0
        %577 = vmatpush1.bf16.msra.mxu0 0
        %578 = vmatprep.subr.bf16.mxu0 0
        %579 = vmatpush1.bf16.msra.mxu0 0
        %580 = vmatprep.mubr.bf16.mxu0 0
        %581 = vmatmul.mubr.bf16.gmra.mrb[0].mxu0 %v546
        %v582 = vpop.f32.mrb[0].mxu0
        %v583 = vadd.f32 %v530, %v582
        %v584 = vpop.f32.mrb[0].mxu0
        %v585 = vpop.f32.mrb[0].mxu0
        %v586 = vpop.f32.mrb[0].mxu0
        %587 = vdwg.mxu0
        %589 = vrot.lane.b32.xlu0 %v583, 120
        %v590 = vpop.permute.xlu0 %589
        %592 = vrot.lane.b32.xlu0 %v583, 112
        %v593 = vpop.permute.xlu0 %592
        %595 = vrot.lane.b32.xlu0 %v583, 104
        %v596 = vpop.permute.xlu0 %595
        %v598 = vpack.c.bf16 %v583, %v583
        %v599 = vpack.c.bf16 %v590, %v590
        %v600 = vpack.c.bf16 %v593, %v593
        %v601 = vpack.c.bf16 %v596, %v596
        %v602 = vld [vmem:[#allocation10] sm:$0xf]
        %v603 = vld [vmem:[#allocation10 + $0x4] sm:$0xf]
        %v604 = vld [vmem:[#allocation10 + $0x8] sm:$0xf]
        %v605 = vld [vmem:[#allocation10 + $0xc] sm:$0xf]
        %v606 = vld [vmem:[#allocation11] sm:$0x1]
        %v608 = vlaneseq
        %v609 = vshrl.u32 %v608, 7
        %v610 = vsub.s32 0, %v609
        %v611 = vrot.slane %v606, %v610
        %v617 = vunpack.c.l.b16 %v602
        %v618 = vunpack.c.l.b16 %v603
        %v619 = vunpack.c.l.b16 %v604
        %v620 = vunpack.c.l.b16 %v605
        %v621 = vpack.c.b16 %v618, %v617
        %v622 = vpack.c.b16 %v620, %v619
        %625 = vmatprep.subr.bf16.mxu0 0
        %626 = vmatpush1.bf16.msra.mxu0 %v621
        %627 = vmatprep.subr.bf16.mxu0 0
        %628 = vmatpush1.bf16.msra.mxu0 %v622
        %629 = vmatprep.subr.bf16.mxu0 0
        %630 = vmatpush1.bf16.msra.mxu0 0
        %631 = vmatprep.subr.bf16.mxu0 0
        %632 = vmatpush1.bf16.msra.mxu0 0
        %633 = vmatprep.subr.bf16.mxu0 0
        %634 = vmatpush1.bf16.msra.mxu0 0
        %635 = vmatprep.subr.bf16.mxu0 0
        %636 = vmatpush1.bf16.msra.mxu0 0
        %637 = vmatprep.subr.bf16.mxu0 0
        %638 = vmatpush1.bf16.msra.mxu0 0
        %639 = vmatprep.subr.bf16.mxu0 0
        %640 = vmatpush1.bf16.msra.mxu0 0
        %641 = vmatprep.subr.bf16.mxu0 0
        %642 = vmatpush1.bf16.msra.mxu0 0
        %643 = vmatprep.subr.bf16.mxu0 0
        %644 = vmatpush1.bf16.msra.mxu0 0
        %645 = vmatprep.subr.bf16.mxu0 0
        %646 = vmatpush1.bf16.msra.mxu0 0
        %647 = vmatprep.subr.bf16.mxu0 0
        %648 = vmatpush1.bf16.msra.mxu0 0
        %649 = vmatprep.subr.bf16.mxu0 0
        %650 = vmatpush1.bf16.msra.mxu0 0
        %651 = vmatprep.subr.bf16.mxu0 0
        %652 = vmatpush1.bf16.msra.mxu0 0
        %653 = vmatprep.subr.bf16.mxu0 0
        %654 = vmatpush1.bf16.msra.mxu0 0
        %655 = vmatprep.subr.bf16.mxu0 0
        %656 = vmatpush1.bf16.msra.mxu0 0
        %657 = vmatprep.mubr.bf16.mxu0 0
        %658 = vmatmul.mubr.bf16.gmra.mrb[0].mxu0 %v546
        %v659 = vpop.f32.mrb[0].mxu0
        %v660 = vadd.f32 %v611, %v659
        %v661 = vpop.f32.mrb[0].mxu0
        %v662 = vpop.f32.mrb[0].mxu0
        %v663 = vpop.f32.mrb[0].mxu0
        %664 = vdwg.mxu0
        %666 = vrot.lane.b32.xlu0 %v660, 120
        %v667 = vpop.permute.xlu0 %666
        %669 = vrot.lane.b32.xlu0 %v660, 112
        %v670 = vpop.permute.xlu0 %669
        %672 = vrot.lane.b32.xlu0 %v660, 104
        %v673 = vpop.permute.xlu0 %672
        %v675 = vpack.c.bf16 %v660, %v660
        %v676 = vpack.c.bf16 %v667, %v667
        %v677 = vpack.c.bf16 %v670, %v670
        %v678 = vpack.c.bf16 %v673, %v673
        %v679 = vld [vmem:[#allocation13] sm:$0xf]
        %v680 = vld [vmem:[#allocation13 + $0x4] sm:$0xf]
        %v681 = vld [vmem:[#allocation13 + $0x8] sm:$0xf]
        %v682 = vld [vmem:[#allocation13 + $0xc] sm:$0xf]
        %v683 = vld [vmem:[#allocation14] sm:$0x1]
        %v685 = vlaneseq
        %v686 = vshrl.u32 %v685, 7
        %v687 = vsub.s32 0, %v686
        %v688 = vrot.slane %v683, %v687
        %v694 = vunpack.c.l.b16 %v679
        %v695 = vunpack.c.l.b16 %v680
        %v696 = vunpack.c.l.b16 %v681
        %v697 = vunpack.c.l.b16 %v682
        %v698 = vpack.c.b16 %v695, %v694
        %v699 = vpack.c.b16 %v697, %v696
        %702 = vmatprep.subr.bf16.mxu0 0
        %703 = vmatpush1.bf16.msra.mxu0 %v698
        %704 = vmatprep.subr.bf16.mxu0 0
        %705 = vmatpush1.bf16.msra.mxu0 %v699
        %706 = vmatprep.subr.bf16.mxu0 0
        %707 = vmatpush1.bf16.msra.mxu0 0
        %708 = vmatprep.subr.bf16.mxu0 0
        %709 = vmatpush1.bf16.msra.mxu0 0
        %710 = vmatprep.subr.bf16.mxu0 0
        %711 = vmatpush1.bf16.msra.mxu0 0
        %712 = vmatprep.subr.bf16.mxu0 0
        %713 = vmatpush1.bf16.msra.mxu0 0
        %714 = vmatprep.subr.bf16.mxu0 0
        %715 = vmatpush1.bf16.msra.mxu0 0
        %716 = vmatprep.subr.bf16.mxu0 0
        %717 = vmatpush1.bf16.msra.mxu0 0
        %718 = vmatprep.subr.bf16.mxu0 0
        %719 = vmatpush1.bf16.msra.mxu0 0
        %720 = vmatprep.subr.bf16.mxu0 0
        %721 = vmatpush1.bf16.msra.mxu0 0
        %722 = vmatprep.subr.bf16.mxu0 0
        %723 = vmatpush1.bf16.msra.mxu0 0
        %724 = vmatprep.subr.bf16.mxu0 0
        %725 = vmatpush1.bf16.msra.mxu0 0
        %726 = vmatprep.subr.bf16.mxu0 0
        %727 = vmatpush1.bf16.msra.mxu0 0
        %728 = vmatprep.subr.bf16.mxu0 0
        %729 = vmatpush1.bf16.msra.mxu0 0
        %730 = vmatprep.subr.bf16.mxu0 0
        %731 = vmatpush1.bf16.msra.mxu0 0
        %732 = vmatprep.subr.bf16.mxu0 0
        %733 = vmatpush1.bf16.msra.mxu0 0
        %734 = vmatprep.mubr.bf16.mxu0 0
        %735 = vmatmul.mubr.bf16.gmra.mrb[0].mxu0 %v546
        %v736 = vpop.f32.mrb[0].mxu0
        %v737 = vadd.f32 %v688, %v736
        %v738 = vpop.f32.mrb[0].mxu0
        %v739 = vpop.f32.mrb[0].mxu0
        %v740 = vpop.f32.mrb[0].mxu0
        %741 = vdwg.mxu0
        %743 = vrot.lane.b32.xlu0 %v737, 120
        %v744 = vpop.permute.xlu0 %743
        %746 = vrot.lane.b32.xlu0 %v737, 112
        %v747 = vpop.permute.xlu0 %746
        %749 = vrot.lane.b32.xlu0 %v737, 104
        %v750 = vpop.permute.xlu0 %749
        %v752 = vpack.c.bf16 %v737, %v737
        %v753 = vpack.c.bf16 %v744, %v744
        %v754 = vpack.c.bf16 %v747, %v747
        %v755 = vpack.c.bf16 %v750, %v750
        %v757 = vlaneseq
        %v758 = vshrl.u32 %v757, 7
        %v759 = vsub.s32 0, %v758
        %v760 = vrot.slane %v520, %v759
        %vm762 = vcmask 64512
        %v764 = vsel %vm762, %v598, 0
        %v767 = vsel %vm762, %v675, 0
        %769 = vmatprep.subr.bf16.mxu0 0
        %770 = vmatpush1.bf16.xpose.msra.mxu0 %v767
        %771 = vmatprep.subr.bf16.mxu0 0
        %772 = vmatpush1.bf16.xpose.msra.mxu0 0
        %773 = vmatprep.subr.bf16.mxu0 0
        %774 = vmatpush1.bf16.xpose.msra.mxu0 0
        %775 = vmatprep.subr.bf16.mxu0 0
        %776 = vmatpush1.bf16.xpose.msra.mxu0 0
        %777 = vmatprep.subr.bf16.mxu0 0
        %778 = vmatpush1.bf16.xpose.msra.mxu0 0
        %779 = vmatprep.subr.bf16.mxu0 0
        %780 = vmatpush1.bf16.xpose.msra.mxu0 0
        %781 = vmatprep.subr.bf16.mxu0 0
        %782 = vmatpush1.bf16.xpose.msra.mxu0 0
        %783 = vmatprep.subr.bf16.mxu0 0
        %784 = vmatpush1.bf16.xpose.msra.mxu0 0
        %785 = vmatprep.subr.bf16.mxu0 0
        %786 = vmatpush1.bf16.xpose.msra.mxu0 0
        %787 = vmatprep.subr.bf16.mxu0 0
        %788 = vmatpush1.bf16.xpose.msra.mxu0 0
        %789 = vmatprep.subr.bf16.mxu0 0
        %790 = vmatpush1.bf16.xpose.msra.mxu0 0
        %791 = vmatprep.subr.bf16.mxu0 0
        %792 = vmatpush1.bf16.xpose.msra.mxu0 0
        %793 = vmatprep.subr.bf16.mxu0 0
        %794 = vmatpush1.bf16.xpose.msra.mxu0 0
        %795 = vmatprep.subr.bf16.mxu0 0
        %796 = vmatpush1.bf16.xpose.msra.mxu0 0
        %797 = vmatprep.subr.bf16.mxu0 0
        %798 = vmatpush1.bf16.xpose.msra.mxu0 0
        %799 = vmatprep.subr.bf16.mxu0 0
        %800 = vmatpush1.bf16.xpose.msra.mxu0 0
        %801 = vmatprep.mubr.bf16.mxu0 0
        %802 = vmatmul.mubr.bf16.gmra.mrb[0].mxu0 %v764
        %v803 = vpop.f32.mrb[0].mxu0
        %v804 = vadd.f32 %v760, %v803
        %v805 = vpop.f32.mrb[0].mxu0
        %v806 = vpop.f32.mrb[0].mxu0
        %v807 = vpop.f32.mrb[0].mxu0
        %808 = vdwg.mxu0
        %v810 = vsel %vm762, %v599, 0
        %v813 = vsel %vm762, %v676, 0
        %815 = vmatprep.subr.bf16.mxu0 0
        %816 = vmatpush1.bf16.xpose.msra.mxu0 %v813
        %817 = vmatprep.subr.bf16.mxu0 0
        %818 = vmatpush1.bf16.xpose.msra.mxu0 0
        %819 = vmatprep.subr.bf16.mxu0 0
        %820 = vmatpush1.bf16.xpose.msra.mxu0 0
        %821 = vmatprep.subr.bf16.mxu0 0
        %822 = vmatpush1.bf16.xpose.msra.mxu0 0
        %823 = vmatprep.subr.bf16.mxu0 0
        %824 = vmatpush1.bf16.xpose.msra.mxu0 0
        %825 = vmatprep.subr.bf16.mxu0 0
        %826 = vmatpush1.bf16.xpose.msra.mxu0 0
        %827 = vmatprep.subr.bf16.mxu0 0
        %828 = vmatpush1.bf16.xpose.msra.mxu0 0
        %829 = vmatprep.subr.bf16.mxu0 0
        %830 = vmatpush1.bf16.xpose.msra.mxu0 0
        %831 = vmatprep.subr.bf16.mxu0 0
        %832 = vmatpush1.bf16.xpose.msra.mxu0 0
        %833 = vmatprep.subr.bf16.mxu0 0
        %834 = vmatpush1.bf16.xpose.msra.mxu0 0
        %835 = vmatprep.subr.bf16.mxu0 0
        %836 = vmatpush1.bf16.xpose.msra.mxu0 0
        %837 = vmatprep.subr.bf16.mxu0 0
        %838 = vmatpush1.bf16.xpose.msra.mxu0 0
        %839 = vmatprep.subr.bf16.mxu0 0
        %840 = vmatpush1.bf16.xpose.msra.mxu0 0
        %841 = vmatprep.subr.bf16.mxu0 0
        %842 = vmatpush1.bf16.xpose.msra.mxu0 0
        %843 = vmatprep.subr.bf16.mxu0 0
        %844 = vmatpush1.bf16.xpose.msra.mxu0 0
        %845 = vmatprep.subr.bf16.mxu0 0
        %846 = vmatpush1.bf16.xpose.msra.mxu0 0
        %847 = vmatprep.mubr.bf16.mxu0 0
        %848 = vmatmul.mubr.bf16.gmra.mrb[0].mxu0 %v810
        %v849 = vpop.f32.mrb[0].mxu0
        %v850 = vadd.f32 %v760, %v849
        %v851 = vpop.f32.mrb[0].mxu0
        %v852 = vpop.f32.mrb[0].mxu0
        %v853 = vpop.f32.mrb[0].mxu0
        %854 = vdwg.mxu0
        %v856 = vsel %vm762, %v600, 0
        %v859 = vsel %vm762, %v677, 0
        %861 = vmatprep.subr.bf16.mxu0 0
        %862 = vmatpush1.bf16.xpose.msra.mxu0 %v859
        %863 = vmatprep.subr.bf16.mxu0 0
        %864 = vmatpush1.bf16.xpose.msra.mxu0 0
        %865 = vmatprep.subr.bf16.mxu0 0
        %866 = vmatpush1.bf16.xpose.msra.mxu0 0
        %867 = vmatprep.subr.bf16.mxu0 0
        %868 = vmatpush1.bf16.xpose.msra.mxu0 0
        %869 = vmatprep.subr.bf16.mxu0 0
        %870 = vmatpush1.bf16.xpose.msra.mxu0 0
        %871 = vmatprep.subr.bf16.mxu0 0
        %872 = vmatpush1.bf16.xpose.msra.mxu0 0
        %873 = vmatprep.subr.bf16.mxu0 0
        %874 = vmatpush1.bf16.xpose.msra.mxu0 0
        %875 = vmatprep.subr.bf16.mxu0 0
        %876 = vmatpush1.bf16.xpose.msra.mxu0 0
        %877 = vmatprep.subr.bf16.mxu0 0
        %878 = vmatpush1.bf16.xpose.msra.mxu0 0
        %879 = vmatprep.subr.bf16.mxu0 0
        %880 = vmatpush1.bf16.xpose.msra.mxu0 0
        %881 = vmatprep.subr.bf16.mxu0 0
        %882 = vmatpush1.bf16.xpose.msra.mxu0 0
        %883 = vmatprep.subr.bf16.mxu0 0
        %884 = vmatpush1.bf16.xpose.msra.mxu0 0
        %885 = vmatprep.subr.bf16.mxu0 0
        %886 = vmatpush1.bf16.xpose.msra.mxu0 0
        %887 = vmatprep.subr.bf16.mxu0 0
        %888 = vmatpush1.bf16.xpose.msra.mxu0 0
        %889 = vmatprep.subr.bf16.mxu0 0
        %890 = vmatpush1.bf16.xpose.msra.mxu0 0
        %891 = vmatprep.subr.bf16.mxu0 0
        %892 = vmatpush1.bf16.xpose.msra.mxu0 0
        %893 = vmatprep.mubr.bf16.mxu0 0
        %894 = vmatmul.mubr.bf16.gmra.mrb[0].mxu0 %v856
        %v895 = vpop.f32.mrb[0].mxu0
        %v896 = vadd.f32 %v760, %v895
        %v897 = vpop.f32.mrb[0].mxu0
        %v898 = vpop.f32.mrb[0].mxu0
        %v899 = vpop.f32.mrb[0].mxu0
        %900 = vdwg.mxu0
        %v902 = vsel %vm762, %v601, 0
        %v905 = vsel %vm762, %v678, 0
        %907 = vmatprep.subr.bf16.mxu0 0
        %908 = vmatpush1.bf16.xpose.msra.mxu0 %v905
        %909 = vmatprep.subr.bf16.mxu0 0
        %910 = vmatpush1.bf16.xpose.msra.mxu0 0
        %911 = vmatprep.subr.bf16.mxu0 0
        %912 = vmatpush1.bf16.xpose.msra.mxu0 0
        %913 = vmatprep.subr.bf16.mxu0 0
        %914 = vmatpush1.bf16.xpose.msra.mxu0 0
        %915 = vmatprep.subr.bf16.mxu0 0
        %916 = vmatpush1.bf16.xpose.msra.mxu0 0
        %917 = vmatprep.subr.bf16.mxu0 0
        %918 = vmatpush1.bf16.xpose.msra.mxu0 0
        %919 = vmatprep.subr.bf16.mxu0 0
        %920 = vmatpush1.bf16.xpose.msra.mxu0 0
        %921 = vmatprep.subr.bf16.mxu0 0
        %922 = vmatpush1.bf16.xpose.msra.mxu0 0
        %923 = vmatprep.subr.bf16.mxu0 0
        %924 = vmatpush1.bf16.xpose.msra.mxu0 0
        %925 = vmatprep.subr.bf16.mxu0 0
        %926 = vmatpush1.bf16.xpose.msra.mxu0 0
        %927 = vmatprep.subr.bf16.mxu0 0
        %928 = vmatpush1.bf16.xpose.msra.mxu0 0
        %929 = vmatprep.subr.bf16.mxu0 0
        %930 = vmatpush1.bf16.xpose.msra.mxu0 0
        %931 = vmatprep.subr.bf16.mxu0 0
        %932 = vmatpush1.bf16.xpose.msra.mxu0 0
        %933 = vmatprep.subr.bf16.mxu0 0
        %934 = vmatpush1.bf16.xpose.msra.mxu0 0
        %935 = vmatprep.subr.bf16.mxu0 0
        %936 = vmatpush1.bf16.xpose.msra.mxu0 0
        %937 = vmatprep.subr.bf16.mxu0 0
        %938 = vmatpush1.bf16.xpose.msra.mxu0 0
        %939 = vmatprep.mubr.bf16.mxu0 0
        %940 = vmatmul.mubr.bf16.gmra.mrb[0].mxu0 %v902
        %v941 = vpop.f32.mrb[0].mxu0
        %v942 = vadd.f32 %v760, %v941
        %v943 = vpop.f32.mrb[0].mxu0
        %v944 = vpop.f32.mrb[0].mxu0
        %v945 = vpop.f32.mrb[0].mxu0
        %946 = vdwg.mxu0
        %v947 = vsel %vm762, %v804, -inf
        %948 = vmax.xlane.f32.xlu0 %v947
        %v949 = vpop.xlane.xlu0 %948
        %v950 = vsel %vm762, %v850, -inf
        %951 = vmax.xlane.f32.xlu0 %v950
        %v952 = vpop.xlane.xlu0 %951
        %v953 = vsel %vm762, %v896, -inf
        %954 = vmax.xlane.f32.xlu0 %v953
        %v955 = vpop.xlane.xlu0 %954
        %v956 = vsel %vm762, %v942, -inf
        %957 = vmax.xlane.f32.xlu0 %v956
        %v958 = vpop.xlane.xlu0 %957
        %v959 = vsub.f32 %v804, %v949
        %v960 = vsub.f32 %v850, %v952
        %v961 = vsub.f32 %v896, %v955
        %v962 = vsub.f32 %v942, %v958
        %v963 = vmul.f32 %v959, 1.442695
        %v964 = vpow.pop %v963
        %v965 = vmul.f32 %v960, 1.442695
        %v966 = vpow.pop %v965
        %v967 = vmul.f32 %v961, 1.442695
        %v968 = vpow.pop %v967
        %v969 = vmul.f32 %v962, 1.442695
        %v970 = vpow.pop %v969
        %v971 = vsel %vm762, %v964, 0.0
        %972 = vadd.xlane.f32.xlu0 %v971
        %v973 = vpop.xlane.xlu0 %972
        %v974 = vsel %vm762, %v966, 0.0
        %975 = vadd.xlane.f32.xlu0 %v974
        %v976 = vpop.xlane.xlu0 %975
        %v977 = vsel %vm762, %v968, 0.0
        %978 = vadd.xlane.f32.xlu0 %v977
        %v979 = vpop.xlane.xlu0 %978
        %v980 = vsel %vm762, %v970, 0.0
        %981 = vadd.xlane.f32.xlu0 %v980
        %v982 = vpop.xlane.xlu0 %981
        %v983 = vrcp.pop %v973
        %v984 = vrcp.pop %v976
        %v985 = vrcp.pop %v979
        %v986 = vrcp.pop %v982
        %v987 = vmul.f32 %v964, %v983
        %v988 = vmul.f32 %v966, %v984
        %v989 = vmul.f32 %v968, %v985
        %v990 = vmul.f32 %v970, %v986
        %v991 = vpack.c.bf16 %v987, %v987
        %v992 = vpack.c.bf16 %v988, %v988
        %v993 = vpack.c.bf16 %v989, %v989
        %v994 = vpack.c.bf16 %v990, %v990
        %v996 = vsel %vm762, %v991, 0
        %vm998 = vcmask 1043456
        %v1000 = vsel %vm998, %v752, 0
        %1002 = vmatprep.subr.bf16.mxu0 0
        %1003 = vmatpush1.bf16.msra.mxu0 %v1000
        %1004 = vmatprep.subr.bf16.mxu0 0
        %1005 = vmatpush1.bf16.msra.mxu0 0
        %1006 = vmatprep.subr.bf16.mxu0 0
        %1007 = vmatpush1.bf16.msra.mxu0 0
        %1008 = vmatprep.subr.bf16.mxu0 0
        %1009 = vmatpush1.bf16.msra.mxu0 0
        %1010 = vmatprep.subr.bf16.mxu0 0
        %1011 = vmatpush1.bf16.msra.mxu0 0
        %1012 = vmatprep.subr.bf16.mxu0 0
        %1013 = vmatpush1.bf16.msra.mxu0 0
        %1014 = vmatprep.subr.bf16.mxu0 0
        %1015 = vmatpush1.bf16.msra.mxu0 0
        %1016 = vmatprep.subr.bf16.mxu0 0
        %1017 = vmatpush1.bf16.msra.mxu0 0
        %1018 = vmatprep.subr.bf16.mxu0 0
        %1019 = vmatpush1.bf16.msra.mxu0 0
        %1020 = vmatprep.subr.bf16.mxu0 0
        %1021 = vmatpush1.bf16.msra.mxu0 0
        %1022 = vmatprep.subr.bf16.mxu0 0
        %1023 = vmatpush1.bf16.msra.mxu0 0
        %1024 = vmatprep.subr.bf16.mxu0 0
        %1025 = vmatpush1.bf16.msra.mxu0 0
        %1026 = vmatprep.subr.bf16.mxu0 0
        %1027 = vmatpush1.bf16.msra.mxu0 0
        %1028 = vmatprep.subr.bf16.mxu0 0
        %1029 = vmatpush1.bf16.msra.mxu0 0
        %1030 = vmatprep.subr.bf16.mxu0 0
        %1031 = vmatpush1.bf16.msra.mxu0 0
        %1032 = vmatprep.subr.bf16.mxu0 0
        %1033 = vmatpush1.bf16.msra.mxu0 0
        %1034 = vmatprep.mubr.bf16.mxu0 0
        %1035 = vmatmul.mubr.bf16.gmra.mrb[0].mxu0 %v996
        %v1036 = vpop.f32.mrb[0].mxu0
        %v1037 = vadd.f32 0.0, %v1036
        %v1038 = vpop.f32.mrb[0].mxu0
        %v1039 = vpop.f32.mrb[0].mxu0
        %v1040 = vpop.f32.mrb[0].mxu0
        %1041 = vdwg.mxu0
        %v1043 = vsel %vm762, %v992, 0
        %v1046 = vsel %vm998, %v753, 0
        %1048 = vmatprep.subr.bf16.mxu0 0
        %1049 = vmatpush1.bf16.msra.mxu0 %v1046
        %1050 = vmatprep.subr.bf16.mxu0 0
        %1051 = vmatpush1.bf16.msra.mxu0 0
        %1052 = vmatprep.subr.bf16.mxu0 0
        %1053 = vmatpush1.bf16.msra.mxu0 0
        %1054 = vmatprep.subr.bf16.mxu0 0
        %1055 = vmatpush1.bf16.msra.mxu0 0
        %1056 = vmatprep.subr.bf16.mxu0 0
        %1057 = vmatpush1.bf16.msra.mxu0 0
        %1058 = vmatprep.subr.bf16.mxu0 0
        %1059 = vmatpush1.bf16.msra.mxu0 0
        %1060 = vmatprep.subr.bf16.mxu0 0
        %1061 = vmatpush1.bf16.msra.mxu0 0
        %1062 = vmatprep.subr.bf16.mxu0 0
        %1063 = vmatpush1.bf16.msra.mxu0 0
        %1064 = vmatprep.subr.bf16.mxu0 0
        %1065 = vmatpush1.bf16.msra.mxu0 0
        %1066 = vmatprep.subr.bf16.mxu0 0
        %1067 = vmatpush1.bf16.msra.mxu0 0
        %1068 = vmatprep.subr.bf16.mxu0 0
        %1069 = vmatpush1.bf16.msra.mxu0 0
        %1070 = vmatprep.subr.bf16.mxu0 0
        %1071 = vmatpush1.bf16.msra.mxu0 0
        %1072 = vmatprep.subr.bf16.mxu0 0
        %1073 = vmatpush1.bf16.msra.mxu0 0
        %1074 = vmatprep.subr.bf16.mxu0 0
        %1075 = vmatpush1.bf16.msra.mxu0 0
        %1076 = vmatprep.subr.bf16.mxu0 0
        %1077 = vmatpush1.bf16.msra.mxu0 0
        %1078 = vmatprep.subr.bf16.mxu0 0
        %1079 = vmatpush1.bf16.msra.mxu0 0
        %1080 = vmatprep.mubr.bf16.mxu0 0
        %1081 = vmatmul.mubr.bf16.gmra.mrb[0].mxu0 %v1043
        %v1082 = vpop.f32.mrb[0].mxu0
        %v1083 = vadd.f32 0.0, %v1082
        %v1084 = vpop.f32.mrb[0].mxu0
        %v1085 = vpop.f32.mrb[0].mxu0
        %v1086 = vpop.f32.mrb[0].mxu0
        %1087 = vdwg.mxu0
        %v1089 = vsel %vm762, %v993, 0
        %v1092 = vsel %vm998, %v754, 0
        %1094 = vmatprep.subr.bf16.mxu0 0
        %1095 = vmatpush1.bf16.msra.mxu0 %v1092
        %1096 = vmatprep.subr.bf16.mxu0 0
        %1097 = vmatpush1.bf16.msra.mxu0 0
        %1098 = vmatprep.subr.bf16.mxu0 0
        %1099 = vmatpush1.bf16.msra.mxu0 0
        %1100 = vmatprep.subr.bf16.mxu0 0
        %1101 = vmatpush1.bf16.msra.mxu0 0
        %1102 = vmatprep.subr.bf16.mxu0 0
        %1103 = vmatpush1.bf16.msra.mxu0 0
        %1104 = vmatprep.subr.bf16.mxu0 0
        %1105 = vmatpush1.bf16.msra.mxu0 0
        %1106 = vmatprep.subr.bf16.mxu0 0
        %1107 = vmatpush1.bf16.msra.mxu0 0
        %1108 = vmatprep.subr.bf16.mxu0 0
        %1109 = vmatpush1.bf16.msra.mxu0 0
        %1110 = vmatprep.subr.bf16.mxu0 0
        %1111 = vmatpush1.bf16.msra.mxu0 0
        %1112 = vmatprep.subr.bf16.mxu0 0
        %1113 = vmatpush1.bf16.msra.mxu0 0
        %1114 = vmatprep.subr.bf16.mxu0 0
        %1115 = vmatpush1.bf16.msra.mxu0 0
        %1116 = vmatprep.subr.bf16.mxu0 0
        %1117 = vmatpush1.bf16.msra.mxu0 0
        %1118 = vmatprep.subr.bf16.mxu0 0
        %1119 = vmatpush1.bf16.msra.mxu0 0
        %1120 = vmatprep.subr.bf16.mxu0 0
        %1121 = vmatpush1.bf16.msra.mxu0 0
        %1122 = vmatprep.subr.bf16.mxu0 0
        %1123 = vmatpush1.bf16.msra.mxu0 0
        %1124 = vmatprep.subr.bf16.mxu0 0
        %1125 = vmatpush1.bf16.msra.mxu0 0
        %1126 = vmatprep.mubr.bf16.mxu0 0
        %1127 = vmatmul.mubr.bf16.gmra.mrb[0].mxu0 %v1089
        %v1128 = vpop.f32.mrb[0].mxu0
        %v1129 = vadd.f32 0.0, %v1128
        %v1130 = vpop.f32.mrb[0].mxu0
        %v1131 = vpop.f32.mrb[0].mxu0
        %v1132 = vpop.f32.mrb[0].mxu0
        %1133 = vdwg.mxu0
        %v1135 = vsel %vm762, %v994, 0
        %v1138 = vsel %vm998, %v755, 0
        %1140 = vmatprep.subr.bf16.mxu0 0
        %1141 = vmatpush1.bf16.msra.mxu0 %v1138
        %1142 = vmatprep.subr.bf16.mxu0 0
        %1143 = vmatpush1.bf16.msra.mxu0 0
        %1144 = vmatprep.subr.bf16.mxu0 0
        %1145 = vmatpush1.bf16.msra.mxu0 0
        %1146 = vmatprep.subr.bf16.mxu0 0
        %1147 = vmatpush1.bf16.msra.mxu0 0
        %1148 = vmatprep.subr.bf16.mxu0 0
        %1149 = vmatpush1.bf16.msra.mxu0 0
        %1150 = vmatprep.subr.bf16.mxu0 0
        %1151 = vmatpush1.bf16.msra.mxu0 0
        %1152 = vmatprep.subr.bf16.mxu0 0
        %1153 = vmatpush1.bf16.msra.mxu0 0
        %1154 = vmatprep.subr.bf16.mxu0 0
        %1155 = vmatpush1.bf16.msra.mxu0 0
        %1156 = vmatprep.subr.bf16.mxu0 0
        %1157 = vmatpush1.bf16.msra.mxu0 0
        %1158 = vmatprep.subr.bf16.mxu0 0
        %1159 = vmatpush1.bf16.msra.mxu0 0
        %1160 = vmatprep.subr.bf16.mxu0 0
        %1161 = vmatpush1.bf16.msra.mxu0 0
        %1162 = vmatprep.subr.bf16.mxu0 0
        %1163 = vmatpush1.bf16.msra.mxu0 0
        %1164 = vmatprep.subr.bf16.mxu0 0
        %1165 = vmatpush1.bf16.msra.mxu0 0
        %1166 = vmatprep.subr.bf16.mxu0 0
        %1167 = vmatpush1.bf16.msra.mxu0 0
        %1168 = vmatprep.subr.bf16.mxu0 0
        %1169 = vmatpush1.bf16.msra.mxu0 0
        %1170 = vmatprep.subr.bf16.mxu0 0
        %1171 = vmatpush1.bf16.msra.mxu0 0
        %1172 = vmatprep.mubr.bf16.mxu0 0
        %1173 = vmatmul.mubr.bf16.gmra.mrb[0].mxu0 %v1135
        %v1174 = vpop.f32.mrb[0].mxu0
        %v1175 = vadd.f32 0.0, %v1174
        %v1176 = vpop.f32.mrb[0].mxu0
        %v1177 = vpop.f32.mrb[0].mxu0
        %v1178 = vpop.f32.mrb[0].mxu0
        %1179 = vdwg.mxu0
        %v1180 = vpack.c.bf16 %v1037, %v1037
        %v1181 = vpack.c.bf16 %v1083, %v1083
        %v1182 = vpack.c.bf16 %v1129, %v1129
        %v1183 = vpack.c.bf16 %v1175, %v1175
        %v1184 = vld [vmem:[#allocation16] sm:$0xf]
        %v1185 = vld [vmem:[#allocation16 + $0x4] sm:$0xf]
        %v1186 = vld [vmem:[#allocation16 + $0x8] sm:$0xf]
        %v1187 = vld [vmem:[#allocation16 + $0xc] sm:$0xf]
        %v1189 = vsel %vm762, %v1180, 0
        %v1192 = vsel %vm998, %v1184, 0
        %1194 = vmatprep.subr.bf16.mxu0 0
        %1195 = vmatpush1.bf16.msra.mxu0 %v1192
        %1196 = vmatprep.subr.bf16.mxu0 0
        %1197 = vmatpush1.bf16.msra.mxu0 0
        %1198 = vmatprep.subr.bf16.mxu0 0
        %1199 = vmatpush1.bf16.msra.mxu0 0
        %1200 = vmatprep.subr.bf16.mxu0 0
        %1201 = vmatpush1.bf16.msra.mxu0 0
        %1202 = vmatprep.subr.bf16.mxu0 0
        %1203 = vmatpush1.bf16.msra.mxu0 0
        %1204 = vmatprep.subr.bf16.mxu0 0
        %1205 = vmatpush1.bf16.msra.mxu0 0
        %1206 = vmatprep.subr.bf16.mxu0 0
        %1207 = vmatpush1.bf16.msra.mxu0 0
        %1208 = vmatprep.subr.bf16.mxu0 0
        %1209 = vmatpush1.bf16.msra.mxu0 0
        %1210 = vmatprep.subr.bf16.mxu0 0
        %1211 = vmatpush1.bf16.msra.mxu0 0
        %1212 = vmatprep.subr.bf16.mxu0 0
        %1213 = vmatpush1.bf16.msra.mxu0 0
        %1214 = vmatprep.subr.bf16.mxu0 0
        %1215 = vmatpush1.bf16.msra.mxu0 0
        %1216 = vmatprep.subr.bf16.mxu0 0
        %1217 = vmatpush1.bf16.msra.mxu0 0
        %1218 = vmatprep.subr.bf16.mxu0 0
        %1219 = vmatpush1.bf16.msra.mxu0 0
        %1220 = vmatprep.subr.bf16.mxu0 0
        %1221 = vmatpush1.bf16.msra.mxu0 0
        %1222 = vmatprep.subr.bf16.mxu0 0
        %1223 = vmatpush1.bf16.msra.mxu0 0
        %1224 = vmatprep.subr.bf16.mxu0 0
        %1225 = vmatpush1.bf16.msra.mxu0 0
        %1226 = vmatprep.mubr.bf16.mxu0 0
        %1227 = vmatmul.mubr.bf16.gmra.mrb[0].mxu0 %v1189
        %v1228 = vpop.f32.mrb[0].mxu0
        %v1229 = vadd.f32 0.0, %v1228
        %v1230 = vpop.f32.mrb[0].mxu0
        %v1231 = vpop.f32.mrb[0].mxu0
        %v1232 = vpop.f32.mrb[0].mxu0
        %1233 = vdwg.mxu0
        %v1235 = vsel %vm762, %v1181, 0
        %v1238 = vsel %vm998, %v1185, 0
        %1240 = vmatprep.subr.bf16.mxu0 0
        %1241 = vmatpush1.bf16.msra.mxu0 %v1238
        %1242 = vmatprep.subr.bf16.mxu0 0
        %1243 = vmatpush1.bf16.msra.mxu0 0
        %1244 = vmatprep.subr.bf16.mxu0 0
        %1245 = vmatpush1.bf16.msra.mxu0 0
        %1246 = vmatprep.subr.bf16.mxu0 0
        %1247 = vmatpush1.bf16.msra.mxu0 0
        %1248 = vmatprep.subr.bf16.mxu0 0
        %1249 = vmatpush1.bf16.msra.mxu0 0
        %1250 = vmatprep.subr.bf16.mxu0 0
        %1251 = vmatpush1.bf16.msra.mxu0 0
        %1252 = vmatprep.subr.bf16.mxu0 0
        %1253 = vmatpush1.bf16.msra.mxu0 0
        %1254 = vmatprep.subr.bf16.mxu0 0
        %1255 = vmatpush1.bf16.msra.mxu0 0
        %1256 = vmatprep.subr.bf16.mxu0 0
        %1257 = vmatpush1.bf16.msra.mxu0 0
        %1258 = vmatprep.subr.bf16.mxu0 0
        %1259 = vmatpush1.bf16.msra.mxu0 0
        %1260 = vmatprep.subr.bf16.mxu0 0
        %1261 = vmatpush1.bf16.msra.mxu0 0
        %1262 = vmatprep.subr.bf16.mxu0 0
        %1263 = vmatpush1.bf16.msra.mxu0 0
        %1264 = vmatprep.subr.bf16.mxu0 0
        %1265 = vmatpush1.bf16.msra.mxu0 0
        %1266 = vmatprep.subr.bf16.mxu0 0
        %1267 = vmatpush1.bf16.msra.mxu0 0
        %1268 = vmatprep.subr.bf16.mxu0 0
        %1269 = vmatpush1.bf16.msra.mxu0 0
        %1270 = vmatprep.subr.bf16.mxu0 0
        %1271 = vmatpush1.bf16.msra.mxu0 0
        %1272 = vmatprep.mubr.bf16.mxu0 0
        %1273 = vmatmul.mubr.bf16.gmra.mrb[0].mxu0 %v1235
        %v1274 = vpop.f32.mrb[0].mxu0
        %v1275 = vadd.f32 0.0, %v1274
        %v1276 = vpop.f32.mrb[0].mxu0
        %v1277 = vpop.f32.mrb[0].mxu0
        %v1278 = vpop.f32.mrb[0].mxu0
        %1279 = vdwg.mxu0
        %v1281 = vsel %vm762, %v1182, 0
        %v1284 = vsel %vm998, %v1186, 0
        %1286 = vmatprep.subr.bf16.mxu0 0
        %1287 = vmatpush1.bf16.msra.mxu0 %v1284
        %1288 = vmatprep.subr.bf16.mxu0 0
        %1289 = vmatpush1.bf16.msra.mxu0 0
        %1290 = vmatprep.subr.bf16.mxu0 0
        %1291 = vmatpush1.bf16.msra.mxu0 0
        %1292 = vmatprep.subr.bf16.mxu0 0
        %1293 = vmatpush1.bf16.msra.mxu0 0
        %1294 = vmatprep.subr.bf16.mxu0 0
        %1295 = vmatpush1.bf16.msra.mxu0 0
        %1296 = vmatprep.subr.bf16.mxu0 0
        %1297 = vmatpush1.bf16.msra.mxu0 0
        %1298 = vmatprep.subr.bf16.mxu0 0
        %1299 = vmatpush1.bf16.msra.mxu0 0
        %1300 = vmatprep.subr.bf16.mxu0 0
        %1301 = vmatpush1.bf16.msra.mxu0 0
        %1302 = vmatprep.subr.bf16.mxu0 0
        %1303 = vmatpush1.bf16.msra.mxu0 0
        %1304 = vmatprep.subr.bf16.mxu0 0
        %1305 = vmatpush1.bf16.msra.mxu0 0
        %1306 = vmatprep.subr.bf16.mxu0 0
        %1307 = vmatpush1.bf16.msra.mxu0 0
        %1308 = vmatprep.subr.bf16.mxu0 0
        %1309 = vmatpush1.bf16.msra.mxu0 0
        %1310 = vmatprep.subr.bf16.mxu0 0
        %1311 = vmatpush1.bf16.msra.mxu0 0
        %1312 = vmatprep.subr.bf16.mxu0 0
        %1313 = vmatpush1.bf16.msra.mxu0 0
        %1314 = vmatprep.subr.bf16.mxu0 0
        %1315 = vmatpush1.bf16.msra.mxu0 0
        %1316 = vmatprep.subr.bf16.mxu0 0
        %1317 = vmatpush1.bf16.msra.mxu0 0
        %1318 = vmatprep.mubr.bf16.mxu0 0
        %1319 = vmatmul.mubr.bf16.gmra.mrb[0].mxu0 %v1281
        %v1320 = vpop.f32.mrb[0].mxu0
        %v1321 = vadd.f32 0.0, %v1320
        %v1322 = vpop.f32.mrb[0].mxu0
        %v1323 = vpop.f32.mrb[0].mxu0
        %v1324 = vpop.f32.mrb[0].mxu0
        %1325 = vdwg.mxu0
        %v1327 = vsel %vm762, %v1183, 0
        %v1330 = vsel %vm998, %v1187, 0
        %1332 = vmatprep.subr.bf16.mxu0 0
        %1333 = vmatpush1.bf16.msra.mxu0 %v1330
        %1334 = vmatprep.subr.bf16.mxu0 0
        %1335 = vmatpush1.bf16.msra.mxu0 0
        %1336 = vmatprep.subr.bf16.mxu0 0
        %1337 = vmatpush1.bf16.msra.mxu0 0
        %1338 = vmatprep.subr.bf16.mxu0 0
        %1339 = vmatpush1.bf16.msra.mxu0 0
        %1340 = vmatprep.subr.bf16.mxu0 0
        %1341 = vmatpush1.bf16.msra.mxu0 0
        %1342 = vmatprep.subr.bf16.mxu0 0
        %1343 = vmatpush1.bf16.msra.mxu0 0
        %1344 = vmatprep.subr.bf16.mxu0 0
        %1345 = vmatpush1.bf16.msra.mxu0 0
        %1346 = vmatprep.subr.bf16.mxu0 0
        %1347 = vmatpush1.bf16.msra.mxu0 0
        %1348 = vmatprep.subr.bf16.mxu0 0
        %1349 = vmatpush1.bf16.msra.mxu0 0
        %1350 = vmatprep.subr.bf16.mxu0 0
        %1351 = vmatpush1.bf16.msra.mxu0 0
        %1352 = vmatprep.subr.bf16.mxu0 0
        %1353 = vmatpush1.bf16.msra.mxu0 0
        %1354 = vmatprep.subr.bf16.mxu0 0
        %1355 = vmatpush1.bf16.msra.mxu0 0
        %1356 = vmatprep.subr.bf16.mxu0 0
        %1357 = vmatpush1.bf16.msra.mxu0 0
        %1358 = vmatprep.subr.bf16.mxu0 0
        %1359 = vmatpush1.bf16.msra.mxu0 0
        %1360 = vmatprep.subr.bf16.mxu0 0
        %1361 = vmatpush1.bf16.msra.mxu0 0
        %1362 = vmatprep.subr.bf16.mxu0 0
        %1363 = vmatpush1.bf16.msra.mxu0 0
        %1364 = vmatprep.mubr.bf16.mxu0 0
        %1365 = vmatmul.mubr.bf16.gmra.mrb[0].mxu0 %v1327
        %v1366 = vpop.f32.mrb[0].mxu0
        %v1367 = vadd.f32 0.0, %v1366
        %v1368 = vpop.f32.mrb[0].mxu0
        %v1369 = vpop.f32.mrb[0].mxu0
        %v1370 = vpop.f32.mrb[0].mxu0
        %1371 = vdwg.mxu0
        %v1372 = vsel %vm544, %v1229, 0.0
        %v1373 = vsel %vm544, %v1275, 0.0
        %v1374 = vadd.f32 %v1372, %v1373
        %v1375 = vsel %vm544, %v1321, 0.0
        %v1376 = vadd.f32 %v1374, %v1375
        %v1377 = vsel %vm544, %v1367, 0.0
        %v1378 = vadd.f32 %v1376, %v1377
        %v1379 = vld [vmem:[#allocation17] sm:$0x1]
        %v1381 = vlaneseq
        %v1382 = vshrl.u32 %v1381, 7
        %v1383 = vsub.s32 0, %v1382
        %v1384 = vrot.slane %v1379, %v1383
        %v1386 = vadd.f32 %v1378, %v1384
        %1387 = vst.msk [vmem:[%s516] sm:$0xff] %vm544, %v1386
        %s1388 = sand.u32 %s262, 1
        %s1389 = scalar_lea.sflag [#allocation4], %s1388
        %s1390 = sand.u32 %s262, 1
        %s1391 = smul.addr %s1390, 8
        %s1392 = scalar_lea.vmem [#allocation19], %s1391
        // Predicated region
        $region101: #{tpu_custom_call.1} parent=59 // pred_check
          %p1393 = pneg %p272
        $region102: #{tpu_custom_call.1} parent=59 // pred_check_branch
          %1395 = sbr.rel (%p1393) target = $region104
        $region103: #{tpu_custom_call.1} parent=59 // pred_region
          %s1397 = ssub.s32 128, 128
          %1398 = vsyncadd %s1389, %s1397
          %s1399 = smul.addr %s34, 128
          %s1400 = scalar_lea.hbm %s10, %s1399
          %s1402 = sshll.u32 %s1392, 4
          %s1403 = int_to_ptr.vmem [resolvable:$true] %s1402
          %1405 = dma.vmem_to_hbm [thread:$0]  %s1403, 128, %s1400, %s1389
        $region104: #{tpu_custom_call.1} parent=59 // pred_fallthru
          _
      $region60: #{tpu_custom_call.1} parent=5 // pred_fallthru
        _
      %p1406 = scmp.le.s32.totalorder 2, %s29
      // Predicated region
      $region105: #{tpu_custom_call.1} parent=5 // pred_check
        %p1407 = pneg %p1406
      $region106: #{tpu_custom_call.1} parent=5 // pred_check_branch
        %1409 = sbr.rel (%p1407) target = $region108
      $region107: #{tpu_custom_call.1} parent=5 // pred_region
        %s1410 = ssub.s32 %s29, 2
        // Predicated region
        $region109: #{tpu_custom_call.1} parent=107 // pred_check
          %p1411 = pneg %p278
        $region110: #{tpu_custom_call.1} parent=107 // pred_check_branch
          %1413 = sbr.rel (%p1411) target = $region112
        $region111: #{tpu_custom_call.1} parent=107 // pred_region
          %s1414 = sand.u32 %s263, 1
          %s1415 = scalar_lea.sflag [#allocation4], %s1414
          %s1416 = sand.u32 %s263, 1
          %s1417 = smul.addr %s1416, 8
          %s1418 = scalar_lea.vmem [#allocation19], %s1417
          %1419 = dma.done %s1415, 128
        $region112: #{tpu_custom_call.1} parent=107 // pred_fallthru
          _
      $region108: #{tpu_custom_call.1} parent=5 // pred_fallthru
        _
    $region6: #{tpu_custom_call.1} parent=1 // loop_footer
      %s33 = sadd.s32 1, %s29
    $region7: #{tpu_custom_call.1} parent=1 // loop_footer_branch
      %28 = sbr.rel target = $region3
    $region8: #{tpu_custom_call.1} parent=1 // loop_exit
      _
    %1420 = vsyncpa [#allocation3], 1
    %s1421 = scalar_lea.sflag [#allocation3], 1
    %1422 = vsyncpa %s1421, 1
    %1423 = vsyncpa [#allocation6], 1
    %s1424 = scalar_lea.sflag [#allocation6], 1
    %1425 = vsyncpa %s1424, 1
    %1426 = vsyncpa [#allocation9], 1
    %1427 = vsyncpa [#allocation12], 1
    %1428 = vsyncpa [#allocation15], 1
    %1429 = vsyncpa [#allocation18], 1
    %1430 = vsyncpa [#allocation4], 1
    %s1431 = scalar_lea.sflag [#allocation4], 1
    %1432 = vsyncpa %s1431, 1

</llo_original>
